<compile_context>
chip_gen: v7x
topology: tpu7x:2x2x1
jax: 0.10.0
libtpu: 0.0.40
codegen_flags: <defaults>
</compile_context>

<pallas_src>
import jax
import jax.numpy as jnp
from jax.experimental import pallas as pl
from jax.experimental.pallas import tpu as pltpu

# ---------------------------------------------------------------------------
# constants coming from the module (params['vit_b16'] / hard-coded numbers)
# ---------------------------------------------------------------------------
RES = 224                         # params['vit_b16']['resolution']
CROP_LO, CROP_HI = 20, 204
CROP = CROP_HI - CROP_LO          # 184
PATCH = 16
GRID14 = RES // PATCH             # 14
L_TOKENS = GRID14 * GRID14        # 196
IMG_C = 3
FEAT_C = 32                       # small stand-in for CLIP's 512-dim output
PATCH_DIM = IMG_C * PATCH * PATCH # 768
LANE = 128                        # pad feature dim to a lane-dense width


# ---------------------------------------------------------------------------
# Pallas kernels
# ---------------------------------------------------------------------------
def _crop_upsample_kernel(img_ref, wx_ref, wy_ref, out_ref):
    """Fused crop(20:204) + bilinear 184->224 (align_corners=True).

    img_ref/out_ref: (1, C*224, 224)  -- channel c lives in rows [c*224,(c+1)*224)
    wx_ref, wy_ref : (224, 224)       -- interp matrices with the crop folded in
    """
    flat = img_ref[0]                                    # (C*224, 224)
    n_chan = flat.shape[0] // RES
    # x-pass: ONE MXU matmul over all channels (M = C*224).
    tmp = jnp.dot(flat, wx_ref[...], preferred_element_type=jnp.float32)
    # y-pass: per-channel (224,224) @ (224,224) matmuls (M=224, good MXU util).
    for c in range(n_chan):
        plane = tmp[c * RES:(c + 1) * RES, :]
        out_ref[0, c * RES:(c + 1) * RES, :] = jnp.dot(
            wy_ref[...], plane, preferred_element_type=jnp.float32
        ).astype(out_ref.dtype)


def _embed_l2_kernel(p_ref, w_ref, o_ref):
    """Patch-embed matmul with fused L2-normalization epilogue.

    p_ref: (1, 196, 768)   patches for one batch element
    w_ref: (768, N_PAD)    zero-padded embed weight (lane-dense N)
    o_ref: (1, 196, N_PAD) L2-normalized features
    """
    x = jnp.dot(p_ref[0], w_ref[...], preferred_element_type=jnp.float32)
    # padded columns are exactly zero -> they do not affect the norm
    ssq = jnp.sum(x * x, axis=-1, keepdims=True)
    inv = jax.lax.rsqrt(ssq + 1e-12)      # tiny eps guards all-zero rows
    o_ref[0] = (x * inv).astype(o_ref.dtype)


# ---------------------------------------------------------------------------
# host-side helpers (weight / interp-matrix preprocessing, free at trace time)
# ---------------------------------------------------------------------------
def _interp_matrix(out_size, in_size):
    """Row-interpolation matrix for bilinear align_corners=True."""
    i = jnp.arange(out_size, dtype=jnp.float32)
    src = i * (in_size - 1) / (out_size - 1)
    i0 = jnp.clip(jnp.floor(src).astype(jnp.int32), 0, in_size - 1)
    i1 = jnp.clip(i0 + 1, 0, in_size - 1)
    w1 = src - i0.astype(jnp.float32)
    w0 = 1.0 - w1
    return (w0[:, None] * jax.nn.one_hot(i0, in_size, dtype=jnp.float32)
            + w1[:, None] * jax.nn.one_hot(i1, in_size, dtype=jnp.float32))


def _cropped_interp_matrices():
    """224x224 interp matrices with the 20:204 crop baked in (zeros outside)."""
    wy_small = _interp_matrix(RES, CROP)                       # (224, 184)
    wy = jnp.zeros((RES, RES), jnp.float32).at[:, CROP_LO:CROP_HI].set(wy_small)
    wx = jnp.zeros((RES, RES), jnp.float32).at[CROP_LO:CROP_HI, :].set(wy_small.T)
    return wy, wx


# ---------------------------------------------------------------------------
# pallas_call wrappers
# ---------------------------------------------------------------------------
@jax.jit
def crop_upsample_pallas(img):
    """img: (B, C, 224, 224) FULL image -> cropped 20:204 + resized to 224."""
    B, C, H, W = img.shape
    assert H == RES and W == RES
    wy, wx = _cropped_interp_matrices()
    img_flat = img.reshape(B, C * RES, RES)        # free contiguous reshape
    out = pl.pallas_call(
        _crop_upsample_kernel,
        out_shape=jax.ShapeDtypeStruct((B, C * RES, RES), img.dtype),
        grid=(B,),
        in_specs=[
            pl.BlockSpec((1, C * RES, RES), lambda b: (b, 0, 0)),
            pl.BlockSpec((RES, RES), lambda b: (0, 0)),
            pl.BlockSpec((RES, RES), lambda b: (0, 0)),
        ],
        out_specs=pl.BlockSpec((1, C * RES, RES), lambda b: (b, 0, 0)),
        compiler_params=pltpu.CompilerParams(dimension_semantics=("parallel",)),
    )(img_flat, wx, wy)
    return out.reshape(B, C, RES, RES)


@jax.jit
def embed_normalize_pallas(patches, w_embed):
    """patches: (B, 196, 768), w_embed: (768, C) -> (B, 196, C) L2-normalized."""
    B, L, K = patches.shape
    Kw, C = w_embed.shape
    assert Kw == K
    n_pad = max(LANE, ((C + LANE - 1) // LANE) * LANE)     # lane-dense width
    w_pad = jnp.zeros((K, n_pad), jnp.float32).at[:, :C].set(
        w_embed.astype(jnp.float32))
    out = pl.pallas_call(
        _embed_l2_kernel,
        out_shape=jax.ShapeDtypeStruct((B, L, n_pad), jnp.float32),
        grid=(B,),
        in_specs=[
            pl.BlockSpec((1, L, K), lambda b: (b, 0, 0)),
            pl.BlockSpec((K, n_pad), lambda b: (0, 0)),
        ],
        out_specs=pl.BlockSpec((1, L, n_pad), lambda b: (b, 0, 0)),
        compiler_params=pltpu.CompilerParams(dimension_semantics=("parallel",)),
    )(patches, w_pad)
    return out[..., :C]                                    # drop zero padding


def _extract_patches(img_up):
    """(B, 3, 224, 224) -> (B, 196, 768) patches flattened as (c, ph, pw).

    Pure data movement (~0.6 MB per batch element) left to XLA: an in-kernel
    version would need a lane->sublane relayout or block-diagonal weights.
    """
    B = img_up.shape[0]
    p = img_up.reshape(B, IMG_C, GRID14, PATCH, GRID14, PATCH)
    p = p.transpose(0, 2, 4, 1, 3, 5).reshape(B, L_TOKENS, PATCH_DIM)
    return p


# ---------------------------------------------------------------------------
# Stand-ins for external submodules (deterministic, synthetic)
# ---------------------------------------------------------------------------
def stub_get_img(pc, key):
    """Stand-in for RealisticProjection.get_img.

    # TODO(synk): real multi-view point-cloud rasterization (RealisticProjection)
    # is an external module and is not reproduced here.
    Returns img (B, 3, 224, 224), is_seen (B, N), point_loc_in_img (B, N, 2).
    """
    B, N, _ = pc.shape
    k1, k2, k3 = jax.random.split(key, 3)
    img = jax.random.uniform(k1, (B, IMG_C, RES, RES), dtype=jnp.float32)
    is_seen = (jax.random.uniform(k2, (B, N)) > 0.3).astype(jnp.float32)
    is_seen = is_seen + 0.0 * jnp.sum(pc, axis=-1)   # keep pc in the graph
    point_loc = jax.random.uniform(k3, (B, N, 2), minval=0.0, maxval=float(RES),
                                   dtype=jnp.float32)
    return img, is_seen, point_loc


def stub_encode_image(img_up, w_embed):
    """Stand-in for CLIP model.encode_image -> (B, 196, FEAT_C) patch features.

    # TODO(synk): the real ViT-B/16 CLIP image encoder (external pretrained
    # model) is not reproduced; a single patch-embed matmul (+ fused L2 norm
    # done by the caller's kernel) is used instead.
    """
    patches = _extract_patches(img_up)
    return embed_normalize_pallas(patches, w_embed)   # Pallas: matmul + L2 norm


# ---------------------------------------------------------------------------
# Extractor.forward equivalent
# ---------------------------------------------------------------------------
@jax.jit
def extractor_forward(pc, w_embed, key):
    # --- mv_proj ---
    img, is_seen, point_loc_in_img = stub_get_img(pc, key)
    # trivial elementwise rescale: plain jnp, XLA fuses it (no clamp, matching
    # the original module's math).
    point_loc_in_img = jnp.ceil((point_loc_in_img - 20.0) * (224.0 / 184.0))
    img_up = crop_upsample_pallas(img)                 # Pallas: crop + bilinear
    # --- encode + normalize (fused) ---
    x = stub_encode_image(img_up, w_embed)             # Pallas: embed + L2 norm
    # --- reshape (B, L, C) -> (B, C, 14, 14) ---
    B, L, C = x.shape
    x = x.reshape(B, GRID14, GRID14, C).transpose(0, 3, 1, 2)
    return is_seen, point_loc_in_img, x


# ---------------------------------------------------------------------------
if __name__ == "__main__":
    key = jax.random.PRNGKey(0)
    k_pc, k_w, k_stub = jax.random.split(key, 3)

    B, N = 2, 64
    pc = jax.random.uniform(k_pc, (B, N, 3), minval=-1.0, maxval=1.0,
                            dtype=jnp.float32)
    w_embed = (jax.random.normal(k_w, (PATCH_DIM, FEAT_C),
                                 dtype=jnp.float32) * 0.02)

    is_seen, point_loc_in_img, x = extractor_forward(pc, w_embed, k_stub)
    jax.block_until_ready((is_seen, point_loc_in_img, x))

    # sanity checks against pure-JAX references ------------------------------
    img, _, ploc0 = stub_get_img(pc, k_stub)
    img_crop = img[:, :, CROP_LO:CROP_HI, CROP_LO:CROP_HI]
    wy_small = _interp_matrix(RES, CROP)
    ref_up = jnp.einsum('oh,bchw,wp->bcop', wy_small, img_crop, wy_small.T,
                        precision=jax.lax.Precision.HIGHEST)
    got_up = crop_upsample_pallas(img)
    assert jnp.allclose(ref_up, got_up, atol=1e-3), "bilinear/crop mismatch"

    ref_ploc = jnp.ceil((ploc0 - 20.0) * (224.0 / 184.0))
    assert jnp.allclose(ref_ploc, point_loc_in_img), "point-loc mismatch"

    patches_ref = _extract_patches(ref_up)
    feat_ref = jnp.einsum('blk,kc->blc', patches_ref, w_embed,
                          precision=jax.lax.Precision.HIGHEST)
    feat_ref = feat_ref / jnp.linalg.norm(feat_ref, axis=-1, keepdims=True)
    x_ref = feat_ref.reshape(B, GRID14, GRID14, FEAT_C).transpose(0, 3, 1, 2)
    assert jnp.allclose(x_ref, x, atol=2e-3), "embed/normalize mismatch"

    assert is_seen.shape == (B, N)
    assert point_loc_in_img.shape == (B, N, 2)
    assert x.shape == (B, FEAT_C, GRID14, GRID14)
    norms = jnp.linalg.norm(x.transpose(0, 2, 3, 1), axis=-1)
    assert jnp.allclose(norms, 1.0, atol=1e-4), "L2-norm mismatch"

    print("KERNEL_OK")
</pallas_src>

<mosaic_0001>
module attributes {stable_mosaic.version = 11 : i64} {
  func.func @_crop_upsample_kernel(%arg0: i32, %arg1: memref<1x672x224xf32, #tpu.memory_space<vmem>>, %arg2: memref<224x224xf32, #tpu.memory_space<vmem>>, %arg3: memref<224x224xf32, #tpu.memory_space<vmem>>, %arg4: memref<1x672x224xf32, #tpu.memory_space<vmem>>) attributes {dimension_semantics = [#tpu.dimension_semantics<parallel>], iteration_bounds = array<i64: 2>, scalar_prefetch = 0 : i64, scratch_operands = 0 : i64, tpu.core_type = #tpu.core_type<tc>, window_params = [{transform_indices = @transform_0, window_bounds = array<i64: 1, 672, 224>}, {pipeline_mode = #tpu.pipeline_mode<synchronous>, transform_indices = @transform_1, window_bounds = array<i64: 224, 224>}, {pipeline_mode = #tpu.pipeline_mode<synchronous>, transform_indices = @transform_2, window_bounds = array<i64: 224, 224>}, {transform_indices = @transform_3, window_bounds = array<i64: 1, 672, 224>}]} {
    %c0 = arith.constant 0 : index
    %c0_0 = arith.constant 0 : index
    %c0_1 = arith.constant 0 : index
    %0 = vector.load %arg1[%c0, %c0_0, %c0_1] : memref<1x672x224xf32, #tpu.memory_space<vmem>>, vector<1x672x224xf32>
    %1 = vector.shape_cast %0 : vector<1x672x224xf32> to vector<672x224xf32>
    %c0_2 = arith.constant 0 : index
    %c0_3 = arith.constant 0 : index
    %2 = vector.load %arg2[%c0_2, %c0_3] : memref<224x224xf32, #tpu.memory_space<vmem>>, vector<224x224xf32>
    %cst = arith.constant dense<0.000000e+00> : vector<672x224xf32>
    %3 = tpu.matmul %1, %2, %cst {dimension_numbers = #tpu.dot_dimension_numbers<[1], [0], [0], [1], [0, 0, 1, 1], [], []>} : vector<672x224xf32>, vector<224x224xf32>, vector<672x224xf32> -> vector<672x224xf32>
    %4 = vector.extract_strided_slice %3 {offsets = [0, 0], sizes = [224, 224], strides = [1, 1]} : vector<672x224xf32> to vector<224x224xf32>
    %c0_4 = arith.constant 0 : index
    %c0_5 = arith.constant 0 : index
    %5 = vector.load %arg3[%c0_4, %c0_5] : memref<224x224xf32, #tpu.memory_space<vmem>>, vector<224x224xf32>
    %cst_6 = arith.constant dense<0.000000e+00> : vector<224x224xf32>
    %6 = tpu.matmul %5, %4, %cst_6 {dimension_numbers = #tpu.dot_dimension_numbers<[1], [0], [0], [1], [0, 0, 1, 1], [], []>} : vector<224x224xf32>, vector<224x224xf32>, vector<224x224xf32> -> vector<224x224xf32>
    %c0_7 = arith.constant 0 : index
    %c0_8 = arith.constant 0 : index
    %c0_9 = arith.constant 0 : index
    %7 = vector.load %arg4[%c0_7, %c0_8, %c0_9] : memref<1x672x224xf32, #tpu.memory_space<vmem>>, vector<1x224x224xf32>
    %8 = vector.shape_cast %7 : vector<1x224x224xf32> to vector<224x224xf32>
    %9 = vector.shape_cast %6 : vector<224x224xf32> to vector<1x224x224xf32>
    tpu.vector_store %arg4[%c0_7, %c0_8, %c0_9], %9 {strides = array<i32>} : memref<1x672x224xf32, #tpu.memory_space<vmem>>, vector<1x224x224xf32>,
    %10 = vector.extract_strided_slice %3 {offsets = [224, 0], sizes = [224, 224], strides = [1, 1]} : vector<672x224xf32> to vector<224x224xf32>
    %c0_10 = arith.constant 0 : index
    %c0_11 = arith.constant 0 : index
    %11 = vector.load %arg3[%c0_10, %c0_11] : memref<224x224xf32, #tpu.memory_space<vmem>>, vector<224x224xf32>
    %cst_12 = arith.constant dense<0.000000e+00> : vector<224x224xf32>
    %12 = tpu.matmul %11, %10, %cst_12 {dimension_numbers = #tpu.dot_dimension_numbers<[1], [0], [0], [1], [0, 0, 1, 1], [], []>} : vector<224x224xf32>, vector<224x224xf32>, vector<224x224xf32> -> vector<224x224xf32>
    %c0_13 = arith.constant 0 : index
    %c224 = arith.constant 224 : index
    %c0_14 = arith.constant 0 : index
    %13 = vector.load %arg4[%c0_13, %c224, %c0_14] : memref<1x672x224xf32, #tpu.memory_space<vmem>>, vector<1x224x224xf32>
    %14 = vector.shape_cast %13 : vector<1x224x224xf32> to vector<224x224xf32>
    %15 = vector.shape_cast %12 : vector<224x224xf32> to vector<1x224x224xf32>
    tpu.vector_store %arg4[%c0_13, %c224, %c0_14], %15 {strides = array<i32>} : memref<1x672x224xf32, #tpu.memory_space<vmem>>, vector<1x224x224xf32>,
    %16 = vector.extract_strided_slice %3 {offsets = [448, 0], sizes = [224, 224], strides = [1, 1]} : vector<672x224xf32> to vector<224x224xf32>
    %c0_15 = arith.constant 0 : index
    %c0_16 = arith.constant 0 : index
    %17 = vector.load %arg3[%c0_15, %c0_16] : memref<224x224xf32, #tpu.memory_space<vmem>>, vector<224x224xf32>
    %cst_17 = arith.constant dense<0.000000e+00> : vector<224x224xf32>
    %18 = tpu.matmul %17, %16, %cst_17 {dimension_numbers = #tpu.dot_dimension_numbers<[1], [0], [0], [1], [0, 0, 1, 1], [], []>} : vector<224x224xf32>, vector<224x224xf32>, vector<224x224xf32> -> vector<224x224xf32>
    %c0_18 = arith.constant 0 : index
    %c448 = arith.constant 448 : index
    %c0_19 = arith.constant 0 : index
    %19 = vector.load %arg4[%c0_18, %c448, %c0_19] : memref<1x672x224xf32, #tpu.memory_space<vmem>>, vector<1x224x224xf32>
    %20 = vector.shape_cast %19 : vector<1x224x224xf32> to vector<224x224xf32>
    %21 = vector.shape_cast %18 : vector<224x224xf32> to vector<1x224x224xf32>
    tpu.vector_store %arg4[%c0_18, %c448, %c0_19], %21 {strides = array<i32>} : memref<1x672x224xf32, #tpu.memory_space<vmem>>, vector<1x224x224xf32>,
    return
  }
  func.func @transform_0(%arg0: i32) -> (i32, i32, i32) {
    %c0_i32 = arith.constant 0 : i32
    %c0_i32_0 = arith.constant 0 : i32
    %c0_i32_1 = arith.constant 0 : i32
    return %arg0, %c0_i32, %c0_i32_0 : i32, i32, i32
  }
  func.func @transform_1(%arg0: i32) -> (i32, i32) {
    %c0_i32 = arith.constant 0 : i32
    %c0_i32_0 = arith.constant 0 : i32
    %c0_i32_1 = arith.constant 0 : i32
    return %c0_i32, %c0_i32_0 : i32, i32
  }
  func.func @transform_2(%arg0: i32) -> (i32, i32) {
    %c0_i32 = arith.constant 0 : i32
    %c0_i32_0 = arith.constant 0 : i32
    %c0_i32_1 = arith.constant 0 : i32
    return %c0_i32, %c0_i32_0 : i32, i32
  }
  func.func @transform_3(%arg0: i32) -> (i32, i32, i32) {
    %c0_i32 = arith.constant 0 : i32
    %c0_i32_0 = arith.constant 0 : i32
    %c0_i32_1 = arith.constant 0 : i32
    return %arg0, %c0_i32, %c0_i32_0 : i32, i32, i32
  }
}

</mosaic_0001>

<llo_original>
// kernel: crop_upsample_pallas.1
$region0: #{crop_upsample_pallas.1}
  #allocation0 [shape = 'u32[]', space=smem, size = 0x4, offset = 0x4, fixed_abs, tag = 'smem constant byte address 0x4 - core index']
  #allocation1 [shape = 'u32[144,128]{1,0:T(1,128)}', space=vmem, size = 0x12000, scoped, tag = 'internal scratch']
  %s0 = inlined_call_operand.hbm [shape: f32[2,672,224], index: 0, kind: input, shape index: {}]
  %s1 = inlined_call_operand.vmem [shape: f32[224,224], index: 1, kind: input, shape index: {}]
  %s2 = inlined_call_operand.vmem [shape: f32[224,224], index: 2, kind: input, shape index: {}]
  %s3 = inlined_call_operand.hbm [shape: f32[2,672,224], index: 3, kind: output, shape index: {}]
  %s4 = sld [smem:[#allocation0]]
  $region49: #{crop_upsample_pallas.1} parent=0
    _
  %s6 = ssub.s32 1, %s4
  %s7 = scalar_select 0, %s6, %s4
  $region1: #{crop_upsample_pallas.1} parent=0
    #allocation2 [shape = 'u8[1376256]{0}', space=vmem, size = 0x150000, scoped, tag = 'input window, operand 0']
    #allocation3 [shape = 's32[2]{0}', space=sflag, size = 0x8, scoped, tag = 'scoped memory for crop_upsample_pallas.1']
    #allocation4 [shape = 's32[2]{0}', space=sflag, size = 0x8, scoped, tag = 'scoped memory for crop_upsample_pallas.1']
    #allocation5 [shape = 'u8[1376256]{0}', space=vmem, size = 0x150000, scoped, tag = 'output window, operand 0']
    %8 = vsyncpa [#allocation3], 0
    %s9 = scalar_lea.sflag [#allocation3], 1
    %10 = vsyncpa %s9, 0
    %11 = vsyncpa [#allocation4], 0
    %s12 = scalar_lea.sflag [#allocation4], 1
    %13 = vsyncpa %s12, 0
    loop: start=0, step=1, limit=4
    $region2: #{crop_upsample_pallas.1} parent=1 // loop_pre_header
      _
    $region3: #{crop_upsample_pallas.1} parent=1 // loop_header
      %s15 = sphi 0, %s19
      %p16 = scmp.ge.s32.totalorder %s15, 4
      %s25 = sphi 0, %s27
      %s28 = sphi 0, %s25
      %s29 = sphi 0, %s28
      %s45 = sphi 0, %s29
      %s49 = sphi 0, %s49
      %s51 = sphi 0, %s49
      %s52 = sphi 0, %s51
      %s66 = sphi 0, %s52
      %s70 = sphi 0, %s70
      %s72 = sphi 0, %s70
      %s73 = sphi 0, %s72
      %s87 = sphi 0, %s73
      %s93 = sphi 0, %s95
      %s96 = sphi 0, %s93
      %s97 = sphi 0, %s96
      %s113 = sphi 0, %s97
    $region4: #{crop_upsample_pallas.1} parent=1 // loop_header_branch
      %18 = sbr.rel (%p16) target = $region8
    $region5: #{crop_upsample_pallas.1} parent=1 // loop_body
      %s20 = ssub.s32 %s15, 1
      %s21 = ssub.s32 %s15, 2
      %s22 = sadd.s32 %s15, 1
      %s23 = ssub.s32 %s15, %s22
      %p24 = scmp.eq.s32.totalorder %s23, 0
      %s26 = sadd.s32 %s25, 1
      %s27 = scalar_select %p24, %s25, %s26
      %p30 = pneg %p24
      %p31 = scmp.eq.s32.totalorder %s15, 1
      %p32 = por %p30, %p31
      %p33 = scmp.ne.s32.totalorder %s25, %s28
      %p34 = scmp.eq.s32.totalorder %s15, 0
      %p35 = por %p33, %p34
      %p36 = scmp.ne.s32.totalorder %s25, %s28
      %p37 = scmp.eq.s32.totalorder %s20, 1
      %p38 = por %p36, %p37
      %p39 = scmp.ne.s32.totalorder %s28, %s29
      %p40 = scmp.eq.s32.totalorder %s20, 0
      %p41 = por %p39, %p40
      %p42 = scmp.ne.s32.totalorder %s28, %s29
      %p43 = scmp.eq.s32.totalorder %s21, 1
      %p44 = por %p42, %p43
      %p46 = scmp.ne.s32.totalorder %s29, %s45
      %p47 = scmp.eq.s32.totalorder %s21, 0
      %p48 = por %p46, %p47
      %s50 = sadd.s32 %s49, 1
      %p53 = scmp.eq.s32.totalorder %s15, 1
      %p54 = scmp.ne.s32.totalorder %s49, %s51
      %p55 = scmp.eq.s32.totalorder %s15, 0
      %p56 = por %p54, %p55
      %p57 = scmp.ne.s32.totalorder %s49, %s51
      %p58 = scmp.eq.s32.totalorder %s20, 1
      %p59 = por %p57, %p58
      %p60 = scmp.ne.s32.totalorder %s51, %s52
      %p61 = scmp.eq.s32.totalorder %s20, 0
      %p62 = por %p60, %p61
      %p63 = scmp.ne.s32.totalorder %s51, %s52
      %p64 = scmp.eq.s32.totalorder %s21, 1
      %p65 = por %p63, %p64
      %p67 = scmp.ne.s32.totalorder %s52, %s66
      %p68 = scmp.eq.s32.totalorder %s21, 0
      %p69 = por %p67, %p68
      %s71 = sadd.s32 %s70, 1
      %p74 = scmp.eq.s32.totalorder %s15, 1
      %p75 = scmp.ne.s32.totalorder %s70, %s72
      %p76 = scmp.eq.s32.totalorder %s15, 0
      %p77 = por %p75, %p76
      %p78 = scmp.ne.s32.totalorder %s70, %s72
      %p79 = scmp.eq.s32.totalorder %s20, 1
      %p80 = por %p78, %p79
      %p81 = scmp.ne.s32.totalorder %s72, %s73
      %p82 = scmp.eq.s32.totalorder %s20, 0
      %p83 = por %p81, %p82
      %p84 = scmp.ne.s32.totalorder %s72, %s73
      %p85 = scmp.eq.s32.totalorder %s21, 1
      %p86 = por %p84, %p85
      %p88 = scmp.ne.s32.totalorder %s73, %s87
      %p89 = scmp.eq.s32.totalorder %s21, 0
      %p90 = por %p88, %p89
      %s91 = ssub.s32 %s15, %s22
      %p92 = scmp.eq.s32.totalorder %s91, 0
      %s94 = sadd.s32 %s93, 1
      %s95 = scalar_select %p92, %s93, %s94
      %p98 = pneg %p92
      %p99 = scmp.eq.s32.totalorder %s15, 1
      %p100 = por %p98, %p99
      %p101 = scmp.ne.s32.totalorder %s93, %s96
      %p102 = scmp.eq.s32.totalorder %s15, 0
      %p103 = por %p101, %p102
      %p104 = scmp.ne.s32.totalorder %s93, %s96
      %p105 = scmp.eq.s32.totalorder %s20, 1
      %p106 = por %p104, %p105
      %p107 = scmp.ne.s32.totalorder %s96, %s97
      %p108 = scmp.eq.s32.totalorder %s20, 0
      %p109 = por %p107, %p108
      %p110 = scmp.ne.s32.totalorder %s96, %s97
      %p111 = scmp.eq.s32.totalorder %s21, 1
      %p112 = por %p110, %p111
      %p114 = scmp.ne.s32.totalorder %s97, %s113
      %p115 = scmp.eq.s32.totalorder %s21, 0
      %p116 = por %p114, %p115
      %p117 = scmp.le.s32.totalorder 1, %s15
      %p118 = scmp.lt.s32.totalorder %s15, 3
      %p119 = pnand %p117, %p118
      %p120 = pneg %p119
      // Predicated region
      $region9: #{crop_upsample_pallas.1} parent=5 // pred_check
        _
      $region10: #{crop_upsample_pallas.1} parent=5 // pred_check_branch
        %122 = sbr.rel (%p119) target = $region12
      $region11: #{crop_upsample_pallas.1} parent=5 // pred_region
        %s123 = ssub.s32 %s15, 1
        // Predicated region
        $region13: #{crop_upsample_pallas.1} parent=11 // pred_check
          %p124 = pneg %p62
        $region14: #{crop_upsample_pallas.1} parent=11 // pred_check_branch
          %126 = sbr.rel (%p124) target = $region16
        $region15: #{crop_upsample_pallas.1} parent=11 // pred_region
          _
        $region16: #{crop_upsample_pallas.1} parent=11 // pred_fallthru
          _
        // Predicated region
        $region17: #{crop_upsample_pallas.1} parent=11 // pred_check
          %p127 = pneg %p83
        $region18: #{crop_upsample_pallas.1} parent=11 // pred_check_branch
          %129 = sbr.rel (%p127) target = $region20
        $region19: #{crop_upsample_pallas.1} parent=11 // pred_region
          _
        $region20: #{crop_upsample_pallas.1} parent=11 // pred_fallthru
          _
      $region12: #{crop_upsample_pallas.1} parent=5 // pred_fallthru
        _
      %p130 = scmp.lt.s32.totalorder %s15, 2
      // Predicated region
      $region21: #{crop_upsample_pallas.1} parent=5 // pred_check
        %p131 = pneg %p130
      $region22: #{crop_upsample_pallas.1} parent=5 // pred_check_branch
        %133 = sbr.rel (%p131) target = $region24
      $region23: #{crop_upsample_pallas.1} parent=5 // pred_region
        // Predicated region
        $region25: #{crop_upsample_pallas.1} parent=23 // pred_check
          %p134 = pneg %p35
        $region26: #{crop_upsample_pallas.1} parent=23 // pred_check_branch
          %136 = sbr.rel (%p134) target = $region28
        $region27: #{crop_upsample_pallas.1} parent=23 // pred_region
          %s137 = sand.u32 %s25, 1
          %s138 = scalar_lea.sflag [#allocation3], %s137
          %s139 = sand.u32 %s25, 1
          %s140 = smul.addr %s139, 1344
          %s141 = scalar_lea.vmem [#allocation2], %s140
          %s143 = ssub.s32 21504, 21504
          %144 = vsyncadd %s138, %s143
          %s145 = smul.addr %s15, 168
          %s146 = smul.addr %s145, 128
          %s147 = scalar_lea.hbm %s0, %s146
          %s148 = sshll.u32 %s141, 4
          %s149 = int_to_ptr.vmem [resolvable:$true] %s148
          %154 = dma.hbm_to_vmem [thread:$0]  %s147, 21504, %s149, %s138, 256, 256, 16
        $region28: #{crop_upsample_pallas.1} parent=23 // pred_fallthru
          _
      $region24: #{crop_upsample_pallas.1} parent=5 // pred_fallthru
        _
      %p155 = scmp.le.s32.totalorder 1, %s15
      %p156 = scmp.lt.s32.totalorder %s15, 3
      %p157 = pnand %p155, %p156
      %p158 = pneg %p157
      // Predicated region
      $region29: #{crop_upsample_pallas.1} parent=5 // pred_check
        _
      $region30: #{crop_upsample_pallas.1} parent=5 // pred_check_branch
        %160 = sbr.rel (%p157) target = $region32
      $region31: #{crop_upsample_pallas.1} parent=5 // pred_region
        %s161 = ssub.s32 %s15, 1
        %s162 = sand.u32 %s28, 1
        %s163 = scalar_lea.sflag [#allocation3], %s162
        %s164 = sand.u32 %s28, 1
        %s165 = smul.addr %s164, 1344
        %s166 = scalar_lea.vmem [#allocation2], %s165
        // Predicated region
        $region33: #{crop_upsample_pallas.1} parent=31 // pred_check
          %p167 = pneg %p41
        $region34: #{crop_upsample_pallas.1} parent=31 // pred_check_branch
          %169 = sbr.rel (%p167) target = $region36
        $region35: #{crop_upsample_pallas.1} parent=31 // pred_region
          %170 = dma.done %s163, 21504
        $region36: #{crop_upsample_pallas.1} parent=31 // pred_fallthru
          _
        %s171 = sand.u32 %s28, 1
        %s172 = scalar_lea.sflag [#allocation3], %s171
        %s173 = sand.u32 %s28, 1
        %s174 = smul.addr %s173, 1344
        %s175 = scalar_lea.vmem [#allocation2], %s174
        %p176 = pneg %p41
        %p177 = pneg %p38
        %p178 = pneg %p62
        %p179 = pneg %p59
        %p180 = pneg %p83
        %p181 = pneg %p80
        %p182 = pneg %p109
        %p183 = pneg %p106
        %s184 = sand.u32 %s96, 1
        %s185 = scalar_lea.sflag [#allocation4], %s184
        %s186 = sand.u32 %s96, 1
        %s187 = smul.addr %s186, 1344
        %s188 = scalar_lea.vmem [#allocation5], %s187
        %v189 = vld [vmem:[%s166] sm:$0xff]
        %v190 = vld [vmem:[%s166 + $0x8] sm:$0xff]
        %v191 = vld [vmem:[%s166 + $0x10] sm:$0xff]
        %v192 = vld [vmem:[%s166 + $0x18] sm:$0xff]
        %v193 = vld [vmem:[%s166 + $0x20] sm:$0xff]
        %v194 = vld [vmem:[%s166 + $0x28] sm:$0xff]
        %v195 = vld [vmem:[%s166 + $0x30] sm:$0xff]
        %v196 = vld [vmem:[%s166 + $0x38] sm:$0xff]
        %v197 = vld [vmem:[%s166 + $0x40] sm:$0xff]
        %v198 = vld [vmem:[%s166 + $0x48] sm:$0xff]
        %v199 = vld [vmem:[%s166 + $0x50] sm:$0xff]
        %v200 = vld [vmem:[%s166 + $0x58] sm:$0xff]
        %v201 = vld [vmem:[%s166 + $0x60] sm:$0xff]
        %v202 = vld [vmem:[%s166 + $0x68] sm:$0xff]
        %v203 = vld [vmem:[%s166 + $0x70] sm:$0xff]
        %v204 = vld [vmem:[%s166 + $0x78] sm:$0xff]
        %v205 = vld [vmem:[%s166 + $0x80] sm:$0xff]
        %v206 = vld [vmem:[%s166 + $0x88] sm:$0xff]
        %v207 = vld [vmem:[%s166 + $0x90] sm:$0xff]
        %v208 = vld [vmem:[%s166 + $0x98] sm:$0xff]
        %v209 = vld [vmem:[%s166 + $0xa0] sm:$0xff]
        %v210 = vld [vmem:[%s166 + $0xa8] sm:$0xff]
        %v211 = vld [vmem:[%s166 + $0xb0] sm:$0xff]
        %v212 = vld [vmem:[%s166 + $0xb8] sm:$0xff]
        %v213 = vld [vmem:[%s166 + $0xc0] sm:$0xff]
        %v214 = vld [vmem:[%s166 + $0xc8] sm:$0xff]
        %v215 = vld [vmem:[%s166 + $0xd0] sm:$0xff]
        %v216 = vld [vmem:[%s166 + $0xd8] sm:$0xff]
        %v217 = vld [vmem:[%s166 + $0xe0] sm:$0xff]
        %v218 = vld [vmem:[%s166 + $0xe8] sm:$0xff]
        %v219 = vld [vmem:[%s166 + $0xf0] sm:$0xff]
        %v220 = vld [vmem:[%s166 + $0xf8] sm:$0xff]
        %v221 = vld [vmem:[%s166 + $0x100] sm:$0xff]
        %v222 = vld [vmem:[%s166 + $0x108] sm:$0xff]
        %v223 = vld [vmem:[%s166 + $0x110] sm:$0xff]
        %v224 = vld [vmem:[%s166 + $0x118] sm:$0xff]
        %v225 = vld [vmem:[%s166 + $0x120] sm:$0xff]
        %v226 = vld [vmem:[%s166 + $0x128] sm:$0xff]
        %v227 = vld [vmem:[%s166 + $0x130] sm:$0xff]
        %v228 = vld [vmem:[%s166 + $0x138] sm:$0xff]
        %v229 = vld [vmem:[%s166 + $0x140] sm:$0xff]
        %v230 = vld [vmem:[%s166 + $0x148] sm:$0xff]
        %v231 = vld [vmem:[%s166 + $0x150] sm:$0xff]
        %v232 = vld [vmem:[%s166 + $0x158] sm:$0xff]
        %v233 = vld [vmem:[%s166 + $0x160] sm:$0xff]
        %v234 = vld [vmem:[%s166 + $0x168] sm:$0xff]
        %v235 = vld [vmem:[%s166 + $0x170] sm:$0xff]
        %v236 = vld [vmem:[%s166 + $0x178] sm:$0xff]
        %v237 = vld [vmem:[%s166 + $0x180] sm:$0xff]
        %v238 = vld [vmem:[%s166 + $0x188] sm:$0xff]
        %v239 = vld [vmem:[%s166 + $0x190] sm:$0xff]
        %v240 = vld [vmem:[%s166 + $0x198] sm:$0xff]
        %v241 = vld [vmem:[%s166 + $0x1a0] sm:$0xff]
        %v242 = vld [vmem:[%s166 + $0x1a8] sm:$0xff]
        %v243 = vld [vmem:[%s166 + $0x1b0] sm:$0xff]
        %v244 = vld [vmem:[%s166 + $0x1b8] sm:$0xff]
        %v245 = vld [vmem:[%s166 + $0x1c0] sm:$0xff]
        %v246 = vld [vmem:[%s166 + $0x1c8] sm:$0xff]
        %v247 = vld [vmem:[%s166 + $0x1d0] sm:$0xff]
        %v248 = vld [vmem:[%s166 + $0x1d8] sm:$0xff]
        %v249 = vld [vmem:[%s166 + $0x1e0] sm:$0xff]
        %v250 = vld [vmem:[%s166 + $0x1e8] sm:$0xff]
        %v251 = vld [vmem:[%s166 + $0x1f0] sm:$0xff]
        %v252 = vld [vmem:[%s166 + $0x1f8] sm:$0xff]
        %v253 = vld [vmem:[%s166 + $0x200] sm:$0xff]
        %v254 = vld [vmem:[%s166 + $0x208] sm:$0xff]
        %v255 = vld [vmem:[%s166 + $0x210] sm:$0xff]
        %v256 = vld [vmem:[%s166 + $0x218] sm:$0xff]
        %v257 = vld [vmem:[%s166 + $0x220] sm:$0xff]
        %v258 = vld [vmem:[%s166 + $0x228] sm:$0xff]
        %v259 = vld [vmem:[%s166 + $0x230] sm:$0xff]
        %v260 = vld [vmem:[%s166 + $0x238] sm:$0xff]
        %v261 = vld [vmem:[%s166 + $0x240] sm:$0xff]
        %v262 = vld [vmem:[%s166 + $0x248] sm:$0xff]
        %v263 = vld [vmem:[%s166 + $0x250] sm:$0xff]
        %v264 = vld [vmem:[%s166 + $0x258] sm:$0xff]
        %v265 = vld [vmem:[%s166 + $0x260] sm:$0xff]
        %v266 = vld [vmem:[%s166 + $0x268] sm:$0xff]
        %v267 = vld [vmem:[%s166 + $0x270] sm:$0xff]
        %v268 = vld [vmem:[%s166 + $0x278] sm:$0xff]
        %v269 = vld [vmem:[%s166 + $0x280] sm:$0xff]
        %v270 = vld [vmem:[%s166 + $0x288] sm:$0xff]
        %v271 = vld [vmem:[%s166 + $0x290] sm:$0xff]
        %v272 = vld [vmem:[%s166 + $0x298] sm:$0xff]
        %v273 = vld [vmem:[%s166 + $0x2a0] sm:$0xff]
        %v274 = vld [vmem:[%s166 + $0x2a8] sm:$0xff]
        %v275 = vld [vmem:[%s166 + $0x2b0] sm:$0xff]
        %v276 = vld [vmem:[%s166 + $0x2b8] sm:$0xff]
        %v277 = vld [vmem:[%s166 + $0x2c0] sm:$0xff]
        %v278 = vld [vmem:[%s166 + $0x2c8] sm:$0xff]
        %v279 = vld [vmem:[%s166 + $0x2d0] sm:$0xff]
        %v280 = vld [vmem:[%s166 + $0x2d8] sm:$0xff]
        %v281 = vld [vmem:[%s166 + $0x2e0] sm:$0xff]
        %v282 = vld [vmem:[%s166 + $0x2e8] sm:$0xff]
        %v283 = vld [vmem:[%s166 + $0x2f0] sm:$0xff]
        %v284 = vld [vmem:[%s166 + $0x2f8] sm:$0xff]
        %v285 = vld [vmem:[%s166 + $0x300] sm:$0xff]
        %v286 = vld [vmem:[%s166 + $0x308] sm:$0xff]
        %v287 = vld [vmem:[%s166 + $0x310] sm:$0xff]
        %v288 = vld [vmem:[%s166 + $0x318] sm:$0xff]
        %v289 = vld [vmem:[%s166 + $0x320] sm:$0xff]
        %v290 = vld [vmem:[%s166 + $0x328] sm:$0xff]
        %v291 = vld [vmem:[%s166 + $0x330] sm:$0xff]
        %v292 = vld [vmem:[%s166 + $0x338] sm:$0xff]
        %v293 = vld [vmem:[%s166 + $0x340] sm:$0xff]
        %v294 = vld [vmem:[%s166 + $0x348] sm:$0xff]
        %v295 = vld [vmem:[%s166 + $0x350] sm:$0xff]
        %v296 = vld [vmem:[%s166 + $0x358] sm:$0xff]
        %v297 = vld [vmem:[%s166 + $0x360] sm:$0xff]
        %v298 = vld [vmem:[%s166 + $0x368] sm:$0xff]
        %v299 = vld [vmem:[%s166 + $0x370] sm:$0xff]
        %v300 = vld [vmem:[%s166 + $0x378] sm:$0xff]
        %v301 = vld [vmem:[%s166 + $0x380] sm:$0xff]
        %v302 = vld [vmem:[%s166 + $0x388] sm:$0xff]
        %v303 = vld [vmem:[%s166 + $0x390] sm:$0xff]
        %v304 = vld [vmem:[%s166 + $0x398] sm:$0xff]
        %v305 = vld [vmem:[%s166 + $0x3a0] sm:$0xff]
        %v306 = vld [vmem:[%s166 + $0x3a8] sm:$0xff]
        %v307 = vld [vmem:[%s166 + $0x3b0] sm:$0xff]
        %v308 = vld [vmem:[%s166 + $0x3b8] sm:$0xff]
        %v309 = vld [vmem:[%s166 + $0x3c0] sm:$0xff]
        %v310 = vld [vmem:[%s166 + $0x3c8] sm:$0xff]
        %v311 = vld [vmem:[%s166 + $0x3d0] sm:$0xff]
        %v312 = vld [vmem:[%s166 + $0x3d8] sm:$0xff]
        %v313 = vld [vmem:[%s166 + $0x3e0] sm:$0xff]
        %v314 = vld [vmem:[%s166 + $0x3e8] sm:$0xff]
        %v315 = vld [vmem:[%s166 + $0x3f0] sm:$0xff]
        %v316 = vld [vmem:[%s166 + $0x3f8] sm:$0xff]
        %v317 = vld [vmem:[%s166 + $0x400] sm:$0xff]
        %v318 = vld [vmem:[%s166 + $0x408] sm:$0xff]
        %v319 = vld [vmem:[%s166 + $0x410] sm:$0xff]
        %v320 = vld [vmem:[%s166 + $0x418] sm:$0xff]
        %v321 = vld [vmem:[%s166 + $0x420] sm:$0xff]
        %v322 = vld [vmem:[%s166 + $0x428] sm:$0xff]
        %v323 = vld [vmem:[%s166 + $0x430] sm:$0xff]
        %v324 = vld [vmem:[%s166 + $0x438] sm:$0xff]
        %v325 = vld [vmem:[%s166 + $0x440] sm:$0xff]
        %v326 = vld [vmem:[%s166 + $0x448] sm:$0xff]
        %v327 = vld [vmem:[%s166 + $0x450] sm:$0xff]
        %v328 = vld [vmem:[%s166 + $0x458] sm:$0xff]
        %v329 = vld [vmem:[%s166 + $0x460] sm:$0xff]
        %v330 = vld [vmem:[%s166 + $0x468] sm:$0xff]
        %v331 = vld [vmem:[%s166 + $0x470] sm:$0xff]
        %v332 = vld [vmem:[%s166 + $0x478] sm:$0xff]
        %v333 = vld [vmem:[%s166 + $0x480] sm:$0xff]
        %v334 = vld [vmem:[%s166 + $0x488] sm:$0xff]
        %v335 = vld [vmem:[%s166 + $0x490] sm:$0xff]
        %v336 = vld [vmem:[%s166 + $0x498] sm:$0xff]
        %v337 = vld [vmem:[%s166 + $0x4a0] sm:$0xff]
        %v338 = vld [vmem:[%s166 + $0x4a8] sm:$0xff]
        %v339 = vld [vmem:[%s166 + $0x4b0] sm:$0xff]
        %v340 = vld [vmem:[%s166 + $0x4b8] sm:$0xff]
        %v341 = vld [vmem:[%s166 + $0x4c0] sm:$0xff]
        %v342 = vld [vmem:[%s166 + $0x4c8] sm:$0xff]
        %v343 = vld [vmem:[%s166 + $0x4d0] sm:$0xff]
        %v344 = vld [vmem:[%s166 + $0x4d8] sm:$0xff]
        %v345 = vld [vmem:[%s166 + $0x4e0] sm:$0xff]
        %v346 = vld [vmem:[%s166 + $0x4e8] sm:$0xff]
        %v347 = vld [vmem:[%s166 + $0x4f0] sm:$0xff]
        %v348 = vld [vmem:[%s166 + $0x4f8] sm:$0xff]
        %v349 = vld [vmem:[%s166 + $0x500] sm:$0xff]
        %v350 = vld [vmem:[%s166 + $0x508] sm:$0xff]
        %v351 = vld [vmem:[%s166 + $0x510] sm:$0xff]
        %v352 = vld [vmem:[%s166 + $0x518] sm:$0xff]
        %v353 = vld [vmem:[%s166 + $0x520] sm:$0xff]
        %v354 = vld [vmem:[%s166 + $0x528] sm:$0xff]
        %v355 = vld [vmem:[%s166 + $0x530] sm:$0xff]
        %v356 = vld [vmem:[%s166 + $0x538] sm:$0xff]
        %v357 = vld [vmem:[%s1] sm:$0xff]
        %v358 = vld [vmem:[%s1 + $0x8] sm:$0xff]
        %v359 = vld [vmem:[%s1 + $0x10] sm:$0xff]
        %v360 = vld [vmem:[%s1 + $0x18] sm:$0xff]
        %v361 = vld [vmem:[%s1 + $0x20] sm:$0xff]
        %v362 = vld [vmem:[%s1 + $0x28] sm:$0xff]
        %v363 = vld [vmem:[%s1 + $0x30] sm:$0xff]
        %v364 = vld [vmem:[%s1 + $0x38] sm:$0xff]
        %v365 = vld [vmem:[%s1 + $0x40] sm:$0xff]
        %v366 = vld [vmem:[%s1 + $0x48] sm:$0xff]
        %v367 = vld [vmem:[%s1 + $0x50] sm:$0xff]
        %v368 = vld [vmem:[%s1 + $0x58] sm:$0xff]
        %v369 = vld [vmem:[%s1 + $0x60] sm:$0xff]
        %v370 = vld [vmem:[%s1 + $0x68] sm:$0xff]
        %v371 = vld [vmem:[%s1 + $0x70] sm:$0xff]
        %v372 = vld [vmem:[%s1 + $0x78] sm:$0xff]
        %v373 = vld [vmem:[%s1 + $0x80] sm:$0xff]
        %v374 = vld [vmem:[%s1 + $0x88] sm:$0xff]
        %v375 = vld [vmem:[%s1 + $0x90] sm:$0xff]
        %v376 = vld [vmem:[%s1 + $0x98] sm:$0xff]
        %v377 = vld [vmem:[%s1 + $0xa0] sm:$0xff]
        %v378 = vld [vmem:[%s1 + $0xa8] sm:$0xff]
        %v379 = vld [vmem:[%s1 + $0xb0] sm:$0xff]
        %v380 = vld [vmem:[%s1 + $0xb8] sm:$0xff]
        %v381 = vld [vmem:[%s1 + $0xc0] sm:$0xff]
        %v382 = vld [vmem:[%s1 + $0xc8] sm:$0xff]
        %v383 = vld [vmem:[%s1 + $0xd0] sm:$0xff]
        %v384 = vld [vmem:[%s1 + $0xd8] sm:$0xff]
        %v385 = vld [vmem:[%s1 + $0xe0] sm:$0xff]
        %v386 = vld [vmem:[%s1 + $0xe8] sm:$0xff]
        %v387 = vld [vmem:[%s1 + $0xf0] sm:$0xff]
        %v388 = vld [vmem:[%s1 + $0xf8] sm:$0xff]
        %v389 = vld [vmem:[%s1 + $0x100] sm:$0xff]
        %v390 = vld [vmem:[%s1 + $0x108] sm:$0xff]
        %v391 = vld [vmem:[%s1 + $0x110] sm:$0xff]
        %v392 = vld [vmem:[%s1 + $0x118] sm:$0xff]
        %v393 = vld [vmem:[%s1 + $0x120] sm:$0xff]
        %v394 = vld [vmem:[%s1 + $0x128] sm:$0xff]
        %v395 = vld [vmem:[%s1 + $0x130] sm:$0xff]
        %v396 = vld [vmem:[%s1 + $0x138] sm:$0xff]
        %v397 = vld [vmem:[%s1 + $0x140] sm:$0xff]
        %v398 = vld [vmem:[%s1 + $0x148] sm:$0xff]
        %v399 = vld [vmem:[%s1 + $0x150] sm:$0xff]
        %v400 = vld [vmem:[%s1 + $0x158] sm:$0xff]
        %v401 = vld [vmem:[%s1 + $0x160] sm:$0xff]
        %v402 = vld [vmem:[%s1 + $0x168] sm:$0xff]
        %v403 = vld [vmem:[%s1 + $0x170] sm:$0xff]
        %v404 = vld [vmem:[%s1 + $0x178] sm:$0xff]
        %v405 = vld [vmem:[%s1 + $0x180] sm:$0xff]
        %v406 = vld [vmem:[%s1 + $0x188] sm:$0xff]
        %v407 = vld [vmem:[%s1 + $0x190] sm:$0xff]
        %v408 = vld [vmem:[%s1 + $0x198] sm:$0xff]
        %v409 = vld [vmem:[%s1 + $0x1a0] sm:$0xff]
        %v410 = vld [vmem:[%s1 + $0x1a8] sm:$0xff]
        %v411 = vld [vmem:[%s1 + $0x1b0] sm:$0xff]
        %v412 = vld [vmem:[%s1 + $0x1b8] sm:$0xff]
        %vm413 = vcmask 785408
        %v415 = vsel %vm413, %v190, 0
        %v418 = vsel %vm413, %v192, 0
        %v421 = vsel %vm413, %v194, 0
        %v424 = vsel %vm413, %v196, 0
        %v427 = vsel %vm413, %v198, 0
        %v430 = vsel %vm413, %v200, 0
        %v433 = vsel %vm413, %v202, 0
        %v436 = vsel %vm413, %v204, 0
        %v439 = vsel %vm413, %v206, 0
        %v442 = vsel %vm413, %v208, 0
        %v445 = vsel %vm413, %v210, 0
        %v448 = vsel %vm413, %v212, 0
        %v451 = vsel %vm413, %v214, 0
        %v454 = vsel %vm413, %v216, 0
        %v457 = vsel %vm413, %v218, 0
        %v460 = vsel %vm413, %v220, 0
        %v463 = vsel %vm413, %v222, 0
        %v466 = vsel %vm413, %v224, 0
        %v469 = vsel %vm413, %v226, 0
        %v472 = vsel %vm413, %v228, 0
        %v475 = vsel %vm413, %v230, 0
        %v478 = vsel %vm413, %v232, 0
        %v481 = vsel %vm413, %v234, 0
        %v484 = vsel %vm413, %v236, 0
        %v487 = vsel %vm413, %v238, 0
        %v490 = vsel %vm413, %v240, 0
        %v493 = vsel %vm413, %v242, 0
        %v496 = vsel %vm413, %v244, 0
        %v499 = vsel %vm413, %v246, 0
        %v502 = vsel %vm413, %v248, 0
        %v505 = vsel %vm413, %v250, 0
        %v508 = vsel %vm413, %v252, 0
        %v511 = vsel %vm413, %v254, 0
        %v514 = vsel %vm413, %v256, 0
        %v517 = vsel %vm413, %v258, 0
        %v520 = vsel %vm413, %v260, 0
        %v523 = vsel %vm413, %v262, 0
        %v526 = vsel %vm413, %v264, 0
        %v529 = vsel %vm413, %v266, 0
        %v532 = vsel %vm413, %v268, 0
        %v535 = vsel %vm413, %v270, 0
        %v538 = vsel %vm413, %v272, 0
        %v541 = vsel %vm413, %v274, 0
        %v544 = vsel %vm413, %v276, 0
        %v547 = vsel %vm413, %v278, 0
        %v550 = vsel %vm413, %v280, 0
        %v553 = vsel %vm413, %v282, 0
        %v556 = vsel %vm413, %v284, 0
        %v559 = vsel %vm413, %v286, 0
        %v562 = vsel %vm413, %v288, 0
        %v565 = vsel %vm413, %v290, 0
        %v568 = vsel %vm413, %v292, 0
        %v571 = vsel %vm413, %v294, 0
        %v574 = vsel %vm413, %v296, 0
        %v577 = vsel %vm413, %v298, 0
        %v580 = vsel %vm413, %v300, 0
        %v583 = vsel %vm413, %v302, 0
        %v586 = vsel %vm413, %v304, 0
        %v589 = vsel %vm413, %v306, 0
        %v592 = vsel %vm413, %v308, 0
        %v595 = vsel %vm413, %v310, 0
        %v598 = vsel %vm413, %v312, 0
        %v601 = vsel %vm413, %v314, 0
        %v604 = vsel %vm413, %v316, 0
        %v607 = vsel %vm413, %v318, 0
        %v610 = vsel %vm413, %v320, 0
        %v613 = vsel %vm413, %v322, 0
        %v616 = vsel %vm413, %v324, 0
        %v619 = vsel %vm413, %v326, 0
        %v622 = vsel %vm413, %v328, 0
        %v625 = vsel %vm413, %v330, 0
        %v628 = vsel %vm413, %v332, 0
        %v631 = vsel %vm413, %v334, 0
        %v634 = vsel %vm413, %v336, 0
        %v637 = vsel %vm413, %v338, 0
        %v640 = vsel %vm413, %v340, 0
        %v643 = vsel %vm413, %v342, 0
        %v646 = vsel %vm413, %v344, 0
        %v649 = vsel %vm413, %v346, 0
        %v652 = vsel %vm413, %v348, 0
        %v655 = vsel %vm413, %v350, 0
        %v658 = vsel %vm413, %v352, 0
        %v661 = vsel %vm413, %v354, 0
        %v664 = vsel %vm413, %v356, 0
        %666 = vmatprep.subr.mxu0 %v358
        %667 = vmatpush1.msra.mxu0 %v357
        %668 = vmatprep.subr.mxu0 %v360
        %669 = vmatpush1.msra.mxu0 %v359
        %670 = vmatprep.subr.mxu0 %v362
        %671 = vmatpush1.msra.mxu0 %v361
        %672 = vmatprep.subr.mxu0 %v364
        %673 = vmatpush1.msra.mxu0 %v363
        %674 = vmatprep.subr.mxu0 %v366
        %675 = vmatpush1.msra.mxu0 %v365
        %676 = vmatprep.subr.mxu0 %v368
        %677 = vmatpush1.msra.mxu0 %v367
        %678 = vmatprep.subr.mxu0 %v370
        %679 = vmatpush1.msra.mxu0 %v369
        %680 = vmatprep.subr.mxu0 %v372
        %681 = vmatpush1.msra.mxu0 %v371
        %682 = vmatprep.subr.mxu0 %v374
        %683 = vmatpush1.msra.mxu0 %v373
        %684 = vmatprep.subr.mxu0 %v376
        %685 = vmatpush1.msra.mxu0 %v375
        %686 = vmatprep.subr.mxu0 %v378
        %687 = vmatpush1.msra.mxu0 %v377
        %688 = vmatprep.subr.mxu0 %v380
        %689 = vmatpush1.msra.mxu0 %v379
        %690 = vmatprep.subr.mxu0 %v382
        %691 = vmatpush1.msra.mxu0 %v381
        %692 = vmatprep.subr.mxu0 %v384
        %693 = vmatpush1.msra.mxu0 %v383
        %694 = vmatprep.subr.mxu0 %v386
        %695 = vmatpush1.msra.mxu0 %v385
        %696 = vmatprep.subr.mxu0 %v388
        %697 = vmatpush1.msra.mxu0 %v387
        %698 = vmatprep.subr.mxu0 %v390
        %699 = vmatpush1.msra.mxu0 %v389
        %700 = vmatprep.subr.mxu0 %v392
        %701 = vmatpush1.msra.mxu0 %v391
        %702 = vmatprep.subr.mxu0 %v394
        %703 = vmatpush1.msra.mxu0 %v393
        %704 = vmatprep.subr.mxu0 %v396
        %705 = vmatpush1.msra.mxu0 %v395
        %706 = vmatprep.subr.mxu0 %v398
        %707 = vmatpush1.msra.mxu0 %v397
        %708 = vmatprep.subr.mxu0 %v400
        %709 = vmatpush1.msra.mxu0 %v399
        %710 = vmatprep.subr.mxu0 %v402
        %711 = vmatpush1.msra.mxu0 %v401
        %712 = vmatprep.subr.mxu0 %v404
        %713 = vmatpush1.msra.mxu0 %v403
        %714 = vmatprep.subr.mxu0 %v406
        %715 = vmatpush1.msra.mxu0 %v405
        %716 = vmatprep.subr.mxu0 %v408
        %717 = vmatpush1.msra.mxu0 %v407
        %718 = vmatprep.subr.mxu0 %v410
        %719 = vmatpush1.msra.mxu0 %v409
        %720 = vmatprep.subr.mxu0 %v412
        %721 = vmatpush1.msra.mxu0 %v411
        %722 = vmatprep.subr.mxu0 0.0
        %723 = vmatpush1.msra.mxu0 0.0
        %724 = vmatprep.subr.mxu0 0.0
        %725 = vmatpush1.msra.mxu0 0.0
        %726 = vmatprep.subr.mxu0 0.0
        %727 = vmatpush1.msra.mxu0 0.0
        %728 = vmatprep.subr.mxu0 0.0
        %729 = vmatpush1.msra.mxu0 0.0
        %730 = vmatprep.mubr.f32.mxu0 %v415
        %731 = vmatmul.mubr.f32.gmra.mrb[0].mxu0 %v189
        %v732 = vpop.f32.mrb[0].mxu0
        %v733 = vadd.f32 0.0, %v732
        %v734 = vpop.f32.mrb[0].mxu0
        %v735 = vadd.f32 0.0, %v734
        %736 = vmatprep.mubr.f32.mxu0 %v418
        %737 = vmatmul.mubr.f32.gmra.mrb[0].mxu0 %v191
        %v738 = vpop.f32.mrb[0].mxu0
        %v739 = vadd.f32 0.0, %v738
        %v740 = vpop.f32.mrb[0].mxu0
        %v741 = vadd.f32 0.0, %v740
        %742 = vmatprep.mubr.f32.mxu0 %v421
        %743 = vmatmul.mubr.f32.gmra.mrb[0].mxu0 %v193
        %v744 = vpop.f32.mrb[0].mxu0
        %v745 = vadd.f32 0.0, %v744
        %v746 = vpop.f32.mrb[0].mxu0
        %v747 = vadd.f32 0.0, %v746
        %748 = vmatprep.mubr.f32.mxu0 %v424
        %749 = vmatmul.mubr.f32.gmra.mrb[0].mxu0 %v195
        %v750 = vpop.f32.mrb[0].mxu0
        %v751 = vadd.f32 0.0, %v750
        %v752 = vpop.f32.mrb[0].mxu0
        %v753 = vadd.f32 0.0, %v752
        %754 = vmatprep.mubr.f32.mxu0 %v427
        %755 = vmatmul.mubr.f32.gmra.mrb[0].mxu0 %v197
        %v756 = vpop.f32.mrb[0].mxu0
        %v757 = vadd.f32 0.0, %v756
        %v758 = vpop.f32.mrb[0].mxu0
        %v759 = vadd.f32 0.0, %v758
        %760 = vmatprep.mubr.f32.mxu0 %v430
        %761 = vmatmul.mubr.f32.gmra.mrb[0].mxu0 %v199
        %v762 = vpop.f32.mrb[0].mxu0
        %v763 = vadd.f32 0.0, %v762
        %v764 = vpop.f32.mrb[0].mxu0
        %v765 = vadd.f32 0.0, %v764
        %766 = vmatprep.mubr.f32.mxu0 %v433
        %767 = vmatmul.mubr.f32.gmra.mrb[0].mxu0 %v201
        %v768 = vpop.f32.mrb[0].mxu0
        %v769 = vadd.f32 0.0, %v768
        %v770 = vpop.f32.mrb[0].mxu0
        %v771 = vadd.f32 0.0, %v770
        %772 = vmatprep.mubr.f32.mxu0 %v436
        %773 = vmatmul.mubr.f32.gmra.mrb[0].mxu0 %v203
        %v774 = vpop.f32.mrb[0].mxu0
        %v775 = vadd.f32 0.0, %v774
        %v776 = vpop.f32.mrb[0].mxu0
        %v777 = vadd.f32 0.0, %v776
        %778 = vmatprep.mubr.f32.mxu0 %v439
        %779 = vmatmul.mubr.f32.gmra.mrb[0].mxu0 %v205
        %v780 = vpop.f32.mrb[0].mxu0
        %v781 = vadd.f32 0.0, %v780
        %v782 = vpop.f32.mrb[0].mxu0
        %v783 = vadd.f32 0.0, %v782
        %784 = vmatprep.mubr.f32.mxu0 %v442
        %785 = vmatmul.mubr.f32.gmra.mrb[0].mxu0 %v207
        %v786 = vpop.f32.mrb[0].mxu0
        %v787 = vadd.f32 0.0, %v786
        %v788 = vpop.f32.mrb[0].mxu0
        %v789 = vadd.f32 0.0, %v788
        %790 = vmatprep.mubr.f32.mxu0 %v445
        %791 = vmatmul.mubr.f32.gmra.mrb[0].mxu0 %v209
        %v792 = vpop.f32.mrb[0].mxu0
        %v793 = vadd.f32 0.0, %v792
        %v794 = vpop.f32.mrb[0].mxu0
        %v795 = vadd.f32 0.0, %v794
        %796 = vmatprep.mubr.f32.mxu0 %v448
        %797 = vmatmul.mubr.f32.gmra.mrb[0].mxu0 %v211
        %v798 = vpop.f32.mrb[0].mxu0
        %v799 = vadd.f32 0.0, %v798
        %v800 = vpop.f32.mrb[0].mxu0
        %v801 = vadd.f32 0.0, %v800
        %802 = vmatprep.mubr.f32.mxu0 %v451
        %803 = vmatmul.mubr.f32.gmra.mrb[0].mxu0 %v213
        %v804 = vpop.f32.mrb[0].mxu0
        %v805 = vadd.f32 0.0, %v804
        %v806 = vpop.f32.mrb[0].mxu0
        %v807 = vadd.f32 0.0, %v806
        %808 = vmatprep.mubr.f32.mxu0 %v454
        %809 = vmatmul.mubr.f32.gmra.mrb[0].mxu0 %v215
        %v810 = vpop.f32.mrb[0].mxu0
        %v811 = vadd.f32 0.0, %v810
        %v812 = vpop.f32.mrb[0].mxu0
        %v813 = vadd.f32 0.0, %v812
        %814 = vmatprep.mubr.f32.mxu0 %v457
        %815 = vmatmul.mubr.f32.gmra.mrb[0].mxu0 %v217
        %v816 = vpop.f32.mrb[0].mxu0
        %v817 = vadd.f32 0.0, %v816
        %v818 = vpop.f32.mrb[0].mxu0
        %v819 = vadd.f32 0.0, %v818
        %820 = vmatprep.mubr.f32.mxu0 %v460
        %821 = vmatmul.mubr.f32.gmra.mrb[0].mxu0 %v219
        %v822 = vpop.f32.mrb[0].mxu0
        %v823 = vadd.f32 0.0, %v822
        %v824 = vpop.f32.mrb[0].mxu0
        %v825 = vadd.f32 0.0, %v824
        %826 = vmatprep.mubr.f32.mxu0 %v463
        %827 = vmatmul.mubr.f32.gmra.mrb[0].mxu0 %v221
        %v828 = vpop.f32.mrb[0].mxu0
        %v829 = vadd.f32 0.0, %v828
        %v830 = vpop.f32.mrb[0].mxu0
        %v831 = vadd.f32 0.0, %v830
        %832 = vmatprep.mubr.f32.mxu0 %v466
        %833 = vmatmul.mubr.f32.gmra.mrb[0].mxu0 %v223
        %v834 = vpop.f32.mrb[0].mxu0
        %v835 = vadd.f32 0.0, %v834
        %v836 = vpop.f32.mrb[0].mxu0
        %v837 = vadd.f32 0.0, %v836
        %838 = vmatprep.mubr.f32.mxu0 %v469
        %839 = vmatmul.mubr.f32.gmra.mrb[0].mxu0 %v225
        %v840 = vpop.f32.mrb[0].mxu0
        %v841 = vadd.f32 0.0, %v840
        %v842 = vpop.f32.mrb[0].mxu0
        %v843 = vadd.f32 0.0, %v842
        %844 = vmatprep.mubr.f32.mxu0 %v472
        %845 = vmatmul.mubr.f32.gmra.mrb[0].mxu0 %v227
        %v846 = vpop.f32.mrb[0].mxu0
        %v847 = vadd.f32 0.0, %v846
        %v848 = vpop.f32.mrb[0].mxu0
        %v849 = vadd.f32 0.0, %v848
        %850 = vmatprep.mubr.f32.mxu0 %v475
        %851 = vmatmul.mubr.f32.gmra.mrb[0].mxu0 %v229
        %v852 = vpop.f32.mrb[0].mxu0
        %v853 = vadd.f32 0.0, %v852
        %v854 = vpop.f32.mrb[0].mxu0
        %v855 = vadd.f32 0.0, %v854
        %856 = vmatprep.mubr.f32.mxu0 %v478
        %857 = vmatmul.mubr.f32.gmra.mrb[0].mxu0 %v231
        %v858 = vpop.f32.mrb[0].mxu0
        %v859 = vadd.f32 0.0, %v858
        %v860 = vpop.f32.mrb[0].mxu0
        %v861 = vadd.f32 0.0, %v860
        %862 = vmatprep.mubr.f32.mxu0 %v481
        %863 = vmatmul.mubr.f32.gmra.mrb[0].mxu0 %v233
        %v864 = vpop.f32.mrb[0].mxu0
        %v865 = vadd.f32 0.0, %v864
        %v866 = vpop.f32.mrb[0].mxu0
        %v867 = vadd.f32 0.0, %v866
        %868 = vmatprep.mubr.f32.mxu0 %v484
        %869 = vmatmul.mubr.f32.gmra.mrb[0].mxu0 %v235
        %v870 = vpop.f32.mrb[0].mxu0
        %v871 = vadd.f32 0.0, %v870
        %v872 = vpop.f32.mrb[0].mxu0
        %v873 = vadd.f32 0.0, %v872
        %874 = vmatprep.mubr.f32.mxu0 %v487
        %875 = vmatmul.mubr.f32.gmra.mrb[0].mxu0 %v237
        %v876 = vpop.f32.mrb[0].mxu0
        %v877 = vadd.f32 0.0, %v876
        %v878 = vpop.f32.mrb[0].mxu0
        %v879 = vadd.f32 0.0, %v878
        %880 = vmatprep.mubr.f32.mxu0 %v490
        %881 = vmatmul.mubr.f32.gmra.mrb[0].mxu0 %v239
        %v882 = vpop.f32.mrb[0].mxu0
        %v883 = vadd.f32 0.0, %v882
        %v884 = vpop.f32.mrb[0].mxu0
        %v885 = vadd.f32 0.0, %v884
        %886 = vmatprep.mubr.f32.mxu0 %v493
        %887 = vmatmul.mubr.f32.gmra.mrb[0].mxu0 %v241
        %v888 = vpop.f32.mrb[0].mxu0
        %v889 = vadd.f32 0.0, %v888
        %v890 = vpop.f32.mrb[0].mxu0
        %v891 = vadd.f32 0.0, %v890
        %892 = vmatprep.mubr.f32.mxu0 %v496
        %893 = vmatmul.mubr.f32.gmra.mrb[0].mxu0 %v243
        %v894 = vpop.f32.mrb[0].mxu0
        %v895 = vadd.f32 0.0, %v894
        %v896 = vpop.f32.mrb[0].mxu0
        %v897 = vadd.f32 0.0, %v896
        %898 = vmatprep.mubr.f32.mxu0 %v499
        %899 = vmatmul.mubr.f32.gmra.mrb[0].mxu0 %v245
        %v900 = vpop.f32.mrb[0].mxu0
        %v901 = vadd.f32 0.0, %v900
        %v902 = vpop.f32.mrb[0].mxu0
        %v903 = vadd.f32 0.0, %v902
        %904 = vmatprep.mubr.f32.mxu0 %v502
        %905 = vmatmul.mubr.f32.gmra.mrb[0].mxu0 %v247
        %v906 = vpop.f32.mrb[0].mxu0
        %v907 = vadd.f32 0.0, %v906
        %v908 = vpop.f32.mrb[0].mxu0
        %v909 = vadd.f32 0.0, %v908
        %910 = vmatprep.mubr.f32.mxu0 %v505
        %911 = vmatmul.mubr.f32.gmra.mrb[0].mxu0 %v249
        %v912 = vpop.f32.mrb[0].mxu0
        %v913 = vadd.f32 0.0, %v912
        %v914 = vpop.f32.mrb[0].mxu0
        %v915 = vadd.f32 0.0, %v914
        %916 = vmatprep.mubr.f32.mxu0 %v508
        %917 = vmatmul.mubr.f32.gmra.mrb[0].mxu0 %v251
        %v918 = vpop.f32.mrb[0].mxu0
        %v919 = vadd.f32 0.0, %v918
        %v920 = vpop.f32.mrb[0].mxu0
        %v921 = vadd.f32 0.0, %v920
        %922 = vmatprep.mubr.f32.mxu0 %v511
        %923 = vmatmul.mubr.f32.gmra.mrb[0].mxu0 %v253
        %v924 = vpop.f32.mrb[0].mxu0
        %v925 = vadd.f32 0.0, %v924
        %v926 = vpop.f32.mrb[0].mxu0
        %v927 = vadd.f32 0.0, %v926
        %928 = vmatprep.mubr.f32.mxu0 %v514
        %929 = vmatmul.mubr.f32.gmra.mrb[0].mxu0 %v255
        %v930 = vpop.f32.mrb[0].mxu0
        %v931 = vadd.f32 0.0, %v930
        %v932 = vpop.f32.mrb[0].mxu0
        %v933 = vadd.f32 0.0, %v932
        %934 = vmatprep.mubr.f32.mxu0 %v517
        %935 = vmatmul.mubr.f32.gmra.mrb[0].mxu0 %v257
        %v936 = vpop.f32.mrb[0].mxu0
        %v937 = vadd.f32 0.0, %v936
        %v938 = vpop.f32.mrb[0].mxu0
        %v939 = vadd.f32 0.0, %v938
        %940 = vmatprep.mubr.f32.mxu0 %v520
        %941 = vmatmul.mubr.f32.gmra.mrb[0].mxu0 %v259
        %v942 = vpop.f32.mrb[0].mxu0
        %v943 = vadd.f32 0.0, %v942
        %v944 = vpop.f32.mrb[0].mxu0
        %v945 = vadd.f32 0.0, %v944
        %946 = vmatprep.mubr.f32.mxu0 %v523
        %947 = vmatmul.mubr.f32.gmra.mrb[0].mxu0 %v261
        %v948 = vpop.f32.mrb[0].mxu0
        %v949 = vadd.f32 0.0, %v948
        %v950 = vpop.f32.mrb[0].mxu0
        %v951 = vadd.f32 0.0, %v950
        %952 = vmatprep.mubr.f32.mxu0 %v526
        %953 = vmatmul.mubr.f32.gmra.mrb[0].mxu0 %v263
        %v954 = vpop.f32.mrb[0].mxu0
        %v955 = vadd.f32 0.0, %v954
        %v956 = vpop.f32.mrb[0].mxu0
        %v957 = vadd.f32 0.0, %v956
        %958 = vmatprep.mubr.f32.mxu0 %v529
        %959 = vmatmul.mubr.f32.gmra.mrb[0].mxu0 %v265
        %v960 = vpop.f32.mrb[0].mxu0
        %v961 = vadd.f32 0.0, %v960
        %v962 = vpop.f32.mrb[0].mxu0
        %v963 = vadd.f32 0.0, %v962
        %964 = vmatprep.mubr.f32.mxu0 %v532
        %965 = vmatmul.mubr.f32.gmra.mrb[0].mxu0 %v267
        %v966 = vpop.f32.mrb[0].mxu0
        %v967 = vadd.f32 0.0, %v966
        %v968 = vpop.f32.mrb[0].mxu0
        %v969 = vadd.f32 0.0, %v968
        %970 = vmatprep.mubr.f32.mxu0 %v535
        %971 = vmatmul.mubr.f32.gmra.mrb[0].mxu0 %v269
        %v972 = vpop.f32.mrb[0].mxu0
        %v973 = vadd.f32 0.0, %v972
        %v974 = vpop.f32.mrb[0].mxu0
        %v975 = vadd.f32 0.0, %v974
        %976 = vmatprep.mubr.f32.mxu0 %v538
        %977 = vmatmul.mubr.f32.gmra.mrb[0].mxu0 %v271
        %v978 = vpop.f32.mrb[0].mxu0
        %v979 = vadd.f32 0.0, %v978
        %v980 = vpop.f32.mrb[0].mxu0
        %v981 = vadd.f32 0.0, %v980
        %982 = vmatprep.mubr.f32.mxu0 %v541
        %983 = vmatmul.mubr.f32.gmra.mrb[0].mxu0 %v273
        %v984 = vpop.f32.mrb[0].mxu0
        %v985 = vadd.f32 0.0, %v984
        %v986 = vpop.f32.mrb[0].mxu0
        %v987 = vadd.f32 0.0, %v986
        %988 = vmatprep.mubr.f32.mxu0 %v544
        %989 = vmatmul.mubr.f32.gmra.mrb[0].mxu0 %v275
        %v990 = vpop.f32.mrb[0].mxu0
        %v991 = vadd.f32 0.0, %v990
        %v992 = vpop.f32.mrb[0].mxu0
        %v993 = vadd.f32 0.0, %v992
        %994 = vmatprep.mubr.f32.mxu0 %v547
        %995 = vmatmul.mubr.f32.gmra.mrb[0].mxu0 %v277
        %v996 = vpop.f32.mrb[0].mxu0
        %v997 = vadd.f32 0.0, %v996
        %v998 = vpop.f32.mrb[0].mxu0
        %v999 = vadd.f32 0.0, %v998
        %1000 = vmatprep.mubr.f32.mxu0 %v550
        %1001 = vmatmul.mubr.f32.gmra.mrb[0].mxu0 %v279
        %v1002 = vpop.f32.mrb[0].mxu0
        %v1003 = vadd.f32 0.0, %v1002
        %v1004 = vpop.f32.mrb[0].mxu0
        %v1005 = vadd.f32 0.0, %v1004
        %1006 = vmatprep.mubr.f32.mxu0 %v553
        %1007 = vmatmul.mubr.f32.gmra.mrb[0].mxu0 %v281
        %v1008 = vpop.f32.mrb[0].mxu0
        %v1009 = vadd.f32 0.0, %v1008
        %v1010 = vpop.f32.mrb[0].mxu0
        %v1011 = vadd.f32 0.0, %v1010
        %1012 = vmatprep.mubr.f32.mxu0 %v556
        %1013 = vmatmul.mubr.f32.gmra.mrb[0].mxu0 %v283
        %v1014 = vpop.f32.mrb[0].mxu0
        %v1015 = vadd.f32 0.0, %v1014
        %v1016 = vpop.f32.mrb[0].mxu0
        %v1017 = vadd.f32 0.0, %v1016
        %1018 = vmatprep.mubr.f32.mxu0 %v559
        %1019 = vmatmul.mubr.f32.gmra.mrb[0].mxu0 %v285
        %v1020 = vpop.f32.mrb[0].mxu0
        %v1021 = vadd.f32 0.0, %v1020
        %v1022 = vpop.f32.mrb[0].mxu0
        %v1023 = vadd.f32 0.0, %v1022
        %1024 = vmatprep.mubr.f32.mxu0 %v562
        %1025 = vmatmul.mubr.f32.gmra.mrb[0].mxu0 %v287
        %v1026 = vpop.f32.mrb[0].mxu0
        %v1027 = vadd.f32 0.0, %v1026
        %v1028 = vpop.f32.mrb[0].mxu0
        %v1029 = vadd.f32 0.0, %v1028
        %1030 = vmatprep.mubr.f32.mxu0 %v565
        %1031 = vmatmul.mubr.f32.gmra.mrb[0].mxu0 %v289
        %v1032 = vpop.f32.mrb[0].mxu0
        %v1033 = vadd.f32 0.0, %v1032
        %v1034 = vpop.f32.mrb[0].mxu0
        %v1035 = vadd.f32 0.0, %v1034
        %1036 = vmatprep.mubr.f32.mxu0 %v568
        %1037 = vmatmul.mubr.f32.gmra.mrb[0].mxu0 %v291
        %v1038 = vpop.f32.mrb[0].mxu0
        %v1039 = vadd.f32 0.0, %v1038
        %v1040 = vpop.f32.mrb[0].mxu0
        %v1041 = vadd.f32 0.0, %v1040
        %1042 = vmatprep.mubr.f32.mxu0 %v571
        %1043 = vmatmul.mubr.f32.gmra.mrb[0].mxu0 %v293
        %v1044 = vpop.f32.mrb[0].mxu0
        %v1045 = vadd.f32 0.0, %v1044
        %v1046 = vpop.f32.mrb[0].mxu0
        %v1047 = vadd.f32 0.0, %v1046
        %1048 = vmatprep.mubr.f32.mxu0 %v574
        %1049 = vmatmul.mubr.f32.gmra.mrb[0].mxu0 %v295
        %v1050 = vpop.f32.mrb[0].mxu0
        %v1051 = vadd.f32 0.0, %v1050
        %v1052 = vpop.f32.mrb[0].mxu0
        %v1053 = vadd.f32 0.0, %v1052
        %1054 = vmatprep.mubr.f32.mxu0 %v577
        %1055 = vmatmul.mubr.f32.gmra.mrb[0].mxu0 %v297
        %v1056 = vpop.f32.mrb[0].mxu0
        %v1057 = vadd.f32 0.0, %v1056
        %v1058 = vpop.f32.mrb[0].mxu0
        %v1059 = vadd.f32 0.0, %v1058
        %1060 = vmatprep.mubr.f32.mxu0 %v580
        %1061 = vmatmul.mubr.f32.gmra.mrb[0].mxu0 %v299
        %v1062 = vpop.f32.mrb[0].mxu0
        %v1063 = vadd.f32 0.0, %v1062
        %v1064 = vpop.f32.mrb[0].mxu0
        %v1065 = vadd.f32 0.0, %v1064
        %1066 = vmatprep.mubr.f32.mxu0 %v583
        %1067 = vmatmul.mubr.f32.gmra.mrb[0].mxu0 %v301
        %v1068 = vpop.f32.mrb[0].mxu0
        %v1069 = vadd.f32 0.0, %v1068
        %v1070 = vpop.f32.mrb[0].mxu0
        %v1071 = vadd.f32 0.0, %v1070
        %1072 = vmatprep.mubr.f32.mxu0 %v586
        %1073 = vmatmul.mubr.f32.gmra.mrb[0].mxu0 %v303
        %v1074 = vpop.f32.mrb[0].mxu0
        %v1075 = vadd.f32 0.0, %v1074
        %v1076 = vpop.f32.mrb[0].mxu0
        %v1077 = vadd.f32 0.0, %v1076
        %1078 = vmatprep.mubr.f32.mxu0 %v589
        %1079 = vmatmul.mubr.f32.gmra.mrb[0].mxu0 %v305
        %v1080 = vpop.f32.mrb[0].mxu0
        %v1081 = vadd.f32 0.0, %v1080
        %v1082 = vpop.f32.mrb[0].mxu0
        %v1083 = vadd.f32 0.0, %v1082
        %1084 = vmatprep.mubr.f32.mxu0 %v592
        %1085 = vmatmul.mubr.f32.gmra.mrb[0].mxu0 %v307
        %v1086 = vpop.f32.mrb[0].mxu0
        %v1087 = vadd.f32 0.0, %v1086
        %v1088 = vpop.f32.mrb[0].mxu0
        %v1089 = vadd.f32 0.0, %v1088
        %1090 = vmatprep.mubr.f32.mxu0 %v595
        %1091 = vmatmul.mubr.f32.gmra.mrb[0].mxu0 %v309
        %v1092 = vpop.f32.mrb[0].mxu0
        %v1093 = vadd.f32 0.0, %v1092
        %v1094 = vpop.f32.mrb[0].mxu0
        %v1095 = vadd.f32 0.0, %v1094
        %1096 = vmatprep.mubr.f32.mxu0 %v598
        %1097 = vmatmul.mubr.f32.gmra.mrb[0].mxu0 %v311
        %v1098 = vpop.f32.mrb[0].mxu0
        %v1099 = vadd.f32 0.0, %v1098
        %v1100 = vpop.f32.mrb[0].mxu0
        %v1101 = vadd.f32 0.0, %v1100
        %1102 = vmatprep.mubr.f32.mxu0 %v601
        %1103 = vmatmul.mubr.f32.gmra.mrb[0].mxu0 %v313
        %v1104 = vpop.f32.mrb[0].mxu0
        %v1105 = vadd.f32 0.0, %v1104
        %v1106 = vpop.f32.mrb[0].mxu0
        %v1107 = vadd.f32 0.0, %v1106
        %1108 = vmatprep.mubr.f32.mxu0 %v604
        %1109 = vmatmul.mubr.f32.gmra.mrb[0].mxu0 %v315
        %v1110 = vpop.f32.mrb[0].mxu0
        %v1111 = vadd.f32 0.0, %v1110
        %v1112 = vpop.f32.mrb[0].mxu0
        %v1113 = vadd.f32 0.0, %v1112
        %1114 = vmatprep.mubr.f32.mxu0 %v607
        %1115 = vmatmul.mubr.f32.gmra.mrb[0].mxu0 %v317
        %v1116 = vpop.f32.mrb[0].mxu0
        %v1117 = vadd.f32 0.0, %v1116
        %v1118 = vpop.f32.mrb[0].mxu0
        %v1119 = vadd.f32 0.0, %v1118
        %1120 = vmatprep.mubr.f32.mxu0 %v610
        %1121 = vmatmul.mubr.f32.gmra.mrb[0].mxu0 %v319
        %v1122 = vpop.f32.mrb[0].mxu0
        %v1123 = vadd.f32 0.0, %v1122
        %v1124 = vpop.f32.mrb[0].mxu0
        %v1125 = vadd.f32 0.0, %v1124
        %1126 = vmatprep.mubr.f32.mxu0 %v613
        %1127 = vmatmul.mubr.f32.gmra.mrb[0].mxu0 %v321
        %v1128 = vpop.f32.mrb[0].mxu0
        %v1129 = vadd.f32 0.0, %v1128
        %v1130 = vpop.f32.mrb[0].mxu0
        %v1131 = vadd.f32 0.0, %v1130
        %1132 = vmatprep.mubr.f32.mxu0 %v616
        %1133 = vmatmul.mubr.f32.gmra.mrb[0].mxu0 %v323
        %v1134 = vpop.f32.mrb[0].mxu0
        %v1135 = vadd.f32 0.0, %v1134
        %v1136 = vpop.f32.mrb[0].mxu0
        %v1137 = vadd.f32 0.0, %v1136
        %1138 = vmatprep.mubr.f32.mxu0 %v619
        %1139 = vmatmul.mubr.f32.gmra.mrb[0].mxu0 %v325
        %v1140 = vpop.f32.mrb[0].mxu0
        %v1141 = vadd.f32 0.0, %v1140
        %v1142 = vpop.f32.mrb[0].mxu0
        %v1143 = vadd.f32 0.0, %v1142
        %1144 = vmatprep.mubr.f32.mxu0 %v622
        %1145 = vmatmul.mubr.f32.gmra.mrb[0].mxu0 %v327
        %v1146 = vpop.f32.mrb[0].mxu0
        %v1147 = vadd.f32 0.0, %v1146
        %v1148 = vpop.f32.mrb[0].mxu0
        %v1149 = vadd.f32 0.0, %v1148
        %1150 = vmatprep.mubr.f32.mxu0 %v625
        %1151 = vmatmul.mubr.f32.gmra.mrb[0].mxu0 %v329
        %v1152 = vpop.f32.mrb[0].mxu0
        %v1153 = vadd.f32 0.0, %v1152
        %v1154 = vpop.f32.mrb[0].mxu0
        %v1155 = vadd.f32 0.0, %v1154
        %1156 = vmatprep.mubr.f32.mxu0 %v628
        %1157 = vmatmul.mubr.f32.gmra.mrb[0].mxu0 %v331
        %v1158 = vpop.f32.mrb[0].mxu0
        %v1159 = vadd.f32 0.0, %v1158
        %v1160 = vpop.f32.mrb[0].mxu0
        %v1161 = vadd.f32 0.0, %v1160
        %1162 = vmatprep.mubr.f32.mxu0 %v631
        %1163 = vmatmul.mubr.f32.gmra.mrb[0].mxu0 %v333
        %v1164 = vpop.f32.mrb[0].mxu0
        %v1165 = vadd.f32 0.0, %v1164
        %v1166 = vpop.f32.mrb[0].mxu0
        %v1167 = vadd.f32 0.0, %v1166
        %1168 = vmatprep.mubr.f32.mxu0 %v634
        %1169 = vmatmul.mubr.f32.gmra.mrb[0].mxu0 %v335
        %v1170 = vpop.f32.mrb[0].mxu0
        %v1171 = vadd.f32 0.0, %v1170
        %v1172 = vpop.f32.mrb[0].mxu0
        %v1173 = vadd.f32 0.0, %v1172
        %1174 = vmatprep.mubr.f32.mxu0 %v637
        %1175 = vmatmul.mubr.f32.gmra.mrb[0].mxu0 %v337
        %v1176 = vpop.f32.mrb[0].mxu0
        %v1177 = vadd.f32 0.0, %v1176
        %v1178 = vpop.f32.mrb[0].mxu0
        %v1179 = vadd.f32 0.0, %v1178
        %1180 = vmatprep.mubr.f32.mxu0 %v640
        %1181 = vmatmul.mubr.f32.gmra.mrb[0].mxu0 %v339
        %v1182 = vpop.f32.mrb[0].mxu0
        %v1183 = vadd.f32 0.0, %v1182
        %v1184 = vpop.f32.mrb[0].mxu0
        %v1185 = vadd.f32 0.0, %v1184
        %1186 = vmatprep.mubr.f32.mxu0 %v643
        %1187 = vmatmul.mubr.f32.gmra.mrb[0].mxu0 %v341
        %v1188 = vpop.f32.mrb[0].mxu0
        %v1189 = vadd.f32 0.0, %v1188
        %v1190 = vpop.f32.mrb[0].mxu0
        %v1191 = vadd.f32 0.0, %v1190
        %1192 = vmatprep.mubr.f32.mxu0 %v646
        %1193 = vmatmul.mubr.f32.gmra.mrb[0].mxu0 %v343
        %v1194 = vpop.f32.mrb[0].mxu0
        %v1195 = vadd.f32 0.0, %v1194
        %v1196 = vpop.f32.mrb[0].mxu0
        %v1197 = vadd.f32 0.0, %v1196
        %1198 = vmatprep.mubr.f32.mxu0 %v649
        %1199 = vmatmul.mubr.f32.gmra.mrb[0].mxu0 %v345
        %v1200 = vpop.f32.mrb[0].mxu0
        %v1201 = vadd.f32 0.0, %v1200
        %v1202 = vpop.f32.mrb[0].mxu0
        %v1203 = vadd.f32 0.0, %v1202
        %1204 = vmatprep.mubr.f32.mxu0 %v652
        %1205 = vmatmul.mubr.f32.gmra.mrb[0].mxu0 %v347
        %v1206 = vpop.f32.mrb[0].mxu0
        %v1207 = vadd.f32 0.0, %v1206
        %v1208 = vpop.f32.mrb[0].mxu0
        %v1209 = vadd.f32 0.0, %v1208
        %1210 = vmatprep.mubr.f32.mxu0 %v655
        %1211 = vmatmul.mubr.f32.gmra.mrb[0].mxu0 %v349
        %v1212 = vpop.f32.mrb[0].mxu0
        %v1213 = vadd.f32 0.0, %v1212
        %v1214 = vpop.f32.mrb[0].mxu0
        %v1215 = vadd.f32 0.0, %v1214
        %1216 = vmatprep.mubr.f32.mxu0 %v658
        %1217 = vmatmul.mubr.f32.gmra.mrb[0].mxu0 %v351
        %v1218 = vpop.f32.mrb[0].mxu0
        %v1219 = vadd.f32 0.0, %v1218
        %v1220 = vpop.f32.mrb[0].mxu0
        %v1221 = vadd.f32 0.0, %v1220
        %1222 = vmatprep.mubr.f32.mxu0 %v661
        %1223 = vmatmul.mubr.f32.gmra.mrb[0].mxu0 %v353
        %v1224 = vpop.f32.mrb[0].mxu0
        %v1225 = vadd.f32 0.0, %v1224
        %v1226 = vpop.f32.mrb[0].mxu0
        %v1227 = vadd.f32 0.0, %v1226
        %1228 = vmatprep.mubr.f32.mxu0 %v664
        %1229 = vmatmul.mubr.f32.gmra.mrb[0].mxu0 %v355
        %v1230 = vpop.f32.mrb[0].mxu0
        %v1231 = vadd.f32 0.0, %v1230
        %v1232 = vpop.f32.mrb[0].mxu0
        %v1233 = vadd.f32 0.0, %v1232
        %1234 = vdwg.mxu0
        %v1235 = vld [vmem:[%s2] sm:$0xff]
        %v1236 = vld [vmem:[%s2 + $0x8] sm:$0xff]
        %v1237 = vld [vmem:[%s2 + $0x10] sm:$0xff]
        %v1238 = vld [vmem:[%s2 + $0x18] sm:$0xff]
        %v1239 = vld [vmem:[%s2 + $0x20] sm:$0xff]
        %v1240 = vld [vmem:[%s2 + $0x28] sm:$0xff]
        %v1241 = vld [vmem:[%s2 + $0x30] sm:$0xff]
        %v1242 = vld [vmem:[%s2 + $0x38] sm:$0xff]
        %v1243 = vld [vmem:[%s2 + $0x40] sm:$0xff]
        %v1244 = vld [vmem:[%s2 + $0x48] sm:$0xff]
        %v1245 = vld [vmem:[%s2 + $0x50] sm:$0xff]
        %v1246 = vld [vmem:[%s2 + $0x58] sm:$0xff]
        %v1247 = vld [vmem:[%s2 + $0x60] sm:$0xff]
        %v1248 = vld [vmem:[%s2 + $0x68] sm:$0xff]
        %v1249 = vld [vmem:[%s2 + $0x70] sm:$0xff]
        %v1250 = vld [vmem:[%s2 + $0x78] sm:$0xff]
        %v1251 = vld [vmem:[%s2 + $0x80] sm:$0xff]
        %v1252 = vld [vmem:[%s2 + $0x88] sm:$0xff]
        %v1253 = vld [vmem:[%s2 + $0x90] sm:$0xff]
        %v1254 = vld [vmem:[%s2 + $0x98] sm:$0xff]
        %v1255 = vld [vmem:[%s2 + $0xa0] sm:$0xff]
        %v1256 = vld [vmem:[%s2 + $0xa8] sm:$0xff]
        %v1257 = vld [vmem:[%s2 + $0xb0] sm:$0xff]
        %v1258 = vld [vmem:[%s2 + $0xb8] sm:$0xff]
        %v1259 = vld [vmem:[%s2 + $0xc0] sm:$0xff]
        %v1260 = vld [vmem:[%s2 + $0xc8] sm:$0xff]
        %v1261 = vld [vmem:[%s2 + $0xd0] sm:$0xff]
        %v1262 = vld [vmem:[%s2 + $0xd8] sm:$0xff]
        %v1263 = vld [vmem:[%s2 + $0xe0] sm:$0xff]
        %v1264 = vld [vmem:[%s2 + $0xe8] sm:$0xff]
        %v1265 = vld [vmem:[%s2 + $0xf0] sm:$0xff]
        %v1266 = vld [vmem:[%s2 + $0xf8] sm:$0xff]
        %v1267 = vld [vmem:[%s2 + $0x100] sm:$0xff]
        %v1268 = vld [vmem:[%s2 + $0x108] sm:$0xff]
        %v1269 = vld [vmem:[%s2 + $0x110] sm:$0xff]
        %v1270 = vld [vmem:[%s2 + $0x118] sm:$0xff]
        %v1271 = vld [vmem:[%s2 + $0x120] sm:$0xff]
        %v1272 = vld [vmem:[%s2 + $0x128] sm:$0xff]
        %v1273 = vld [vmem:[%s2 + $0x130] sm:$0xff]
        %v1274 = vld [vmem:[%s2 + $0x138] sm:$0xff]
        %v1275 = vld [vmem:[%s2 + $0x140] sm:$0xff]
        %v1276 = vld [vmem:[%s2 + $0x148] sm:$0xff]
        %v1277 = vld [vmem:[%s2 + $0x150] sm:$0xff]
        %v1278 = vld [vmem:[%s2 + $0x158] sm:$0xff]
        %v1279 = vld [vmem:[%s2 + $0x160] sm:$0xff]
        %v1280 = vld [vmem:[%s2 + $0x168] sm:$0xff]
        %v1281 = vld [vmem:[%s2 + $0x170] sm:$0xff]
        %v1282 = vld [vmem:[%s2 + $0x178] sm:$0xff]
        %v1283 = vld [vmem:[%s2 + $0x180] sm:$0xff]
        %v1284 = vld [vmem:[%s2 + $0x188] sm:$0xff]
        %v1285 = vld [vmem:[%s2 + $0x190] sm:$0xff]
        %v1286 = vld [vmem:[%s2 + $0x198] sm:$0xff]
        %v1287 = vld [vmem:[%s2 + $0x1a0] sm:$0xff]
        %v1288 = vld [vmem:[%s2 + $0x1a8] sm:$0xff]
        %v1289 = vld [vmem:[%s2 + $0x1b0] sm:$0xff]
        %v1290 = vld [vmem:[%s2 + $0x1b8] sm:$0xff]
        %v1292 = vsel %vm413, %v1236, 0
        %v1295 = vsel %vm413, %v1238, 0
        %v1298 = vsel %vm413, %v1240, 0
        %v1301 = vsel %vm413, %v1242, 0
        %v1304 = vsel %vm413, %v1244, 0
        %v1307 = vsel %vm413, %v1246, 0
        %v1310 = vsel %vm413, %v1248, 0
        %v1313 = vsel %vm413, %v1250, 0
        %v1316 = vsel %vm413, %v1252, 0
        %v1319 = vsel %vm413, %v1254, 0
        %v1322 = vsel %vm413, %v1256, 0
        %v1325 = vsel %vm413, %v1258, 0
        %v1328 = vsel %vm413, %v1260, 0
        %v1331 = vsel %vm413, %v1262, 0
        %v1334 = vsel %vm413, %v1264, 0
        %v1337 = vsel %vm413, %v1266, 0
        %v1340 = vsel %vm413, %v1268, 0
        %v1343 = vsel %vm413, %v1270, 0
        %v1346 = vsel %vm413, %v1272, 0
        %v1349 = vsel %vm413, %v1274, 0
        %v1352 = vsel %vm413, %v1276, 0
        %v1355 = vsel %vm413, %v1278, 0
        %v1358 = vsel %vm413, %v1280, 0
        %v1361 = vsel %vm413, %v1282, 0
        %v1364 = vsel %vm413, %v1284, 0
        %v1367 = vsel %vm413, %v1286, 0
        %v1370 = vsel %vm413, %v1288, 0
        %v1373 = vsel %vm413, %v1290, 0
        %1375 = vmatprep.subr.mxu0 %v735
        %1376 = vmatpush1.msra.mxu0 %v733
        %1377 = vmatprep.subr.mxu0 %v741
        %1378 = vmatpush1.msra.mxu0 %v739
        %1379 = vmatprep.subr.mxu0 %v747
        %1380 = vmatpush1.msra.mxu0 %v745
        %1381 = vmatprep.subr.mxu0 %v753
        %1382 = vmatpush1.msra.mxu0 %v751
        %1383 = vmatprep.subr.mxu0 %v759
        %1384 = vmatpush1.msra.mxu0 %v757
        %1385 = vmatprep.subr.mxu0 %v765
        %1386 = vmatpush1.msra.mxu0 %v763
        %1387 = vmatprep.subr.mxu0 %v771
        %1388 = vmatpush1.msra.mxu0 %v769
        %1389 = vmatprep.subr.mxu0 %v777
        %1390 = vmatpush1.msra.mxu0 %v775
        %1391 = vmatprep.subr.mxu0 %v783
        %1392 = vmatpush1.msra.mxu0 %v781
        %1393 = vmatprep.subr.mxu0 %v789
        %1394 = vmatpush1.msra.mxu0 %v787
        %1395 = vmatprep.subr.mxu0 %v795
        %1396 = vmatpush1.msra.mxu0 %v793
        %1397 = vmatprep.subr.mxu0 %v801
        %1398 = vmatpush1.msra.mxu0 %v799
        %1399 = vmatprep.subr.mxu0 %v807
        %1400 = vmatpush1.msra.mxu0 %v805
        %1401 = vmatprep.subr.mxu0 %v813
        %1402 = vmatpush1.msra.mxu0 %v811
        %1403 = vmatprep.subr.mxu0 %v819
        %1404 = vmatpush1.msra.mxu0 %v817
        %1405 = vmatprep.subr.mxu0 %v825
        %1406 = vmatpush1.msra.mxu0 %v823
        %1407 = vmatprep.subr.mxu0 %v831
        %1408 = vmatpush1.msra.mxu0 %v829
        %1409 = vmatprep.subr.mxu0 %v837
        %1410 = vmatpush1.msra.mxu0 %v835
        %1411 = vmatprep.subr.mxu0 %v843
        %1412 = vmatpush1.msra.mxu0 %v841
        %1413 = vmatprep.subr.mxu0 %v849
        %1414 = vmatpush1.msra.mxu0 %v847
        %1415 = vmatprep.subr.mxu0 %v855
        %1416 = vmatpush1.msra.mxu0 %v853
        %1417 = vmatprep.subr.mxu0 %v861
        %1418 = vmatpush1.msra.mxu0 %v859
        %1419 = vmatprep.subr.mxu0 %v867
        %1420 = vmatpush1.msra.mxu0 %v865
        %1421 = vmatprep.subr.mxu0 %v873
        %1422 = vmatpush1.msra.mxu0 %v871
        %1423 = vmatprep.subr.mxu0 %v879
        %1424 = vmatpush1.msra.mxu0 %v877
        %1425 = vmatprep.subr.mxu0 %v885
        %1426 = vmatpush1.msra.mxu0 %v883
        %1427 = vmatprep.subr.mxu0 %v891
        %1428 = vmatpush1.msra.mxu0 %v889
        %1429 = vmatprep.subr.mxu0 %v897
        %1430 = vmatpush1.msra.mxu0 %v895
        %1431 = vmatprep.subr.mxu0 0.0
        %1432 = vmatpush1.msra.mxu0 0.0
        %1433 = vmatprep.subr.mxu0 0.0
        %1434 = vmatpush1.msra.mxu0 0.0
        %1435 = vmatprep.subr.mxu0 0.0
        %1436 = vmatpush1.msra.mxu0 0.0
        %1437 = vmatprep.subr.mxu0 0.0
        %1438 = vmatpush1.msra.mxu0 0.0
        %1439 = vmatprep.mubr.f32.mxu0 %v1292
        %1440 = vmatmul.mubr.f32.gmra.mrb[0].mxu0 %v1235
        %v1441 = vpop.f32.mrb[0].mxu0
        %v1442 = vadd.f32 0.0, %v1441
        %v1443 = vpop.f32.mrb[0].mxu0
        %v1444 = vadd.f32 0.0, %v1443
        %1445 = vmatprep.mubr.f32.mxu0 %v1295
        %1446 = vmatmul.mubr.f32.gmra.mrb[0].mxu0 %v1237
        %v1447 = vpop.f32.mrb[0].mxu0
        %v1448 = vadd.f32 0.0, %v1447
        %v1449 = vpop.f32.mrb[0].mxu0
        %v1450 = vadd.f32 0.0, %v1449
        %1451 = vmatprep.mubr.f32.mxu0 %v1298
        %1452 = vmatmul.mubr.f32.gmra.mrb[0].mxu0 %v1239
        %v1453 = vpop.f32.mrb[0].mxu0
        %v1454 = vadd.f32 0.0, %v1453
        %v1455 = vpop.f32.mrb[0].mxu0
        %v1456 = vadd.f32 0.0, %v1455
        %1457 = vmatprep.mubr.f32.mxu0 %v1301
        %1458 = vmatmul.mubr.f32.gmra.mrb[0].mxu0 %v1241
        %v1459 = vpop.f32.mrb[0].mxu0
        %v1460 = vadd.f32 0.0, %v1459
        %v1461 = vpop.f32.mrb[0].mxu0
        %v1462 = vadd.f32 0.0, %v1461
        %1463 = vmatprep.mubr.f32.mxu0 %v1304
        %1464 = vmatmul.mubr.f32.gmra.mrb[0].mxu0 %v1243
        %v1465 = vpop.f32.mrb[0].mxu0
        %v1466 = vadd.f32 0.0, %v1465
        %v1467 = vpop.f32.mrb[0].mxu0
        %v1468 = vadd.f32 0.0, %v1467
        %1469 = vmatprep.mubr.f32.mxu0 %v1307
        %1470 = vmatmul.mubr.f32.gmra.mrb[0].mxu0 %v1245
        %v1471 = vpop.f32.mrb[0].mxu0
        %v1472 = vadd.f32 0.0, %v1471
        %v1473 = vpop.f32.mrb[0].mxu0
        %v1474 = vadd.f32 0.0, %v1473
        %1475 = vmatprep.mubr.f32.mxu0 %v1310
        %1476 = vmatmul.mubr.f32.gmra.mrb[0].mxu0 %v1247
        %v1477 = vpop.f32.mrb[0].mxu0
        %v1478 = vadd.f32 0.0, %v1477
        %v1479 = vpop.f32.mrb[0].mxu0
        %v1480 = vadd.f32 0.0, %v1479
        %1481 = vmatprep.mubr.f32.mxu0 %v1313
        %1482 = vmatmul.mubr.f32.gmra.mrb[0].mxu0 %v1249
        %v1483 = vpop.f32.mrb[0].mxu0
        %v1484 = vadd.f32 0.0, %v1483
        %v1485 = vpop.f32.mrb[0].mxu0
        %v1486 = vadd.f32 0.0, %v1485
        %1487 = vmatprep.mubr.f32.mxu0 %v1316
        %1488 = vmatmul.mubr.f32.gmra.mrb[0].mxu0 %v1251
        %v1489 = vpop.f32.mrb[0].mxu0
        %v1490 = vadd.f32 0.0, %v1489
        %v1491 = vpop.f32.mrb[0].mxu0
        %v1492 = vadd.f32 0.0, %v1491
        %1493 = vmatprep.mubr.f32.mxu0 %v1319
        %1494 = vmatmul.mubr.f32.gmra.mrb[0].mxu0 %v1253
        %v1495 = vpop.f32.mrb[0].mxu0
        %v1496 = vadd.f32 0.0, %v1495
        %v1497 = vpop.f32.mrb[0].mxu0
        %v1498 = vadd.f32 0.0, %v1497
        %1499 = vmatprep.mubr.f32.mxu0 %v1322
        %1500 = vmatmul.mubr.f32.gmra.mrb[0].mxu0 %v1255
        %v1501 = vpop.f32.mrb[0].mxu0
        %v1502 = vadd.f32 0.0, %v1501
        %v1503 = vpop.f32.mrb[0].mxu0
        %v1504 = vadd.f32 0.0, %v1503
        %1505 = vmatprep.mubr.f32.mxu0 %v1325
        %1506 = vmatmul.mubr.f32.gmra.mrb[0].mxu0 %v1257
        %v1507 = vpop.f32.mrb[0].mxu0
        %v1508 = vadd.f32 0.0, %v1507
        %v1509 = vpop.f32.mrb[0].mxu0
        %v1510 = vadd.f32 0.0, %v1509
        %1511 = vmatprep.mubr.f32.mxu0 %v1328
        %1512 = vmatmul.mubr.f32.gmra.mrb[0].mxu0 %v1259
        %v1513 = vpop.f32.mrb[0].mxu0
        %v1514 = vadd.f32 0.0, %v1513
        %v1515 = vpop.f32.mrb[0].mxu0
        %v1516 = vadd.f32 0.0, %v1515
        %1517 = vmatprep.mubr.f32.mxu0 %v1331
        %1518 = vmatmul.mubr.f32.gmra.mrb[0].mxu0 %v1261
        %v1519 = vpop.f32.mrb[0].mxu0
        %v1520 = vadd.f32 0.0, %v1519
        %v1521 = vpop.f32.mrb[0].mxu0
        %v1522 = vadd.f32 0.0, %v1521
        %1523 = vmatprep.mubr.f32.mxu0 %v1334
        %1524 = vmatmul.mubr.f32.gmra.mrb[0].mxu0 %v1263
        %v1525 = vpop.f32.mrb[0].mxu0
        %v1526 = vadd.f32 0.0, %v1525
        %v1527 = vpop.f32.mrb[0].mxu0
        %v1528 = vadd.f32 0.0, %v1527
        %1529 = vmatprep.mubr.f32.mxu0 %v1337
        %1530 = vmatmul.mubr.f32.gmra.mrb[0].mxu0 %v1265
        %v1531 = vpop.f32.mrb[0].mxu0
        %v1532 = vadd.f32 0.0, %v1531
        %v1533 = vpop.f32.mrb[0].mxu0
        %v1534 = vadd.f32 0.0, %v1533
        %1535 = vmatprep.mubr.f32.mxu0 %v1340
        %1536 = vmatmul.mubr.f32.gmra.mrb[0].mxu0 %v1267
        %v1537 = vpop.f32.mrb[0].mxu0
        %v1538 = vadd.f32 0.0, %v1537
        %v1539 = vpop.f32.mrb[0].mxu0
        %v1540 = vadd.f32 0.0, %v1539
        %1541 = vmatprep.mubr.f32.mxu0 %v1343
        %1542 = vmatmul.mubr.f32.gmra.mrb[0].mxu0 %v1269
        %v1543 = vpop.f32.mrb[0].mxu0
        %v1544 = vadd.f32 0.0, %v1543
        %v1545 = vpop.f32.mrb[0].mxu0
        %v1546 = vadd.f32 0.0, %v1545
        %1547 = vmatprep.mubr.f32.mxu0 %v1346
        %1548 = vmatmul.mubr.f32.gmra.mrb[0].mxu0 %v1271
        %v1549 = vpop.f32.mrb[0].mxu0
        %v1550 = vadd.f32 0.0, %v1549
        %v1551 = vpop.f32.mrb[0].mxu0
        %v1552 = vadd.f32 0.0, %v1551
        %1553 = vmatprep.mubr.f32.mxu0 %v1349
        %1554 = vmatmul.mubr.f32.gmra.mrb[0].mxu0 %v1273
        %v1555 = vpop.f32.mrb[0].mxu0
        %v1556 = vadd.f32 0.0, %v1555
        %v1557 = vpop.f32.mrb[0].mxu0
        %v1558 = vadd.f32 0.0, %v1557
        %1559 = vmatprep.mubr.f32.mxu0 %v1352
        %1560 = vmatmul.mubr.f32.gmra.mrb[0].mxu0 %v1275
        %v1561 = vpop.f32.mrb[0].mxu0
        %v1562 = vadd.f32 0.0, %v1561
        %v1563 = vpop.f32.mrb[0].mxu0
        %v1564 = vadd.f32 0.0, %v1563
        %1565 = vmatprep.mubr.f32.mxu0 %v1355
        %1566 = vmatmul.mubr.f32.gmra.mrb[0].mxu0 %v1277
        %v1567 = vpop.f32.mrb[0].mxu0
        %v1568 = vadd.f32 0.0, %v1567
        %v1569 = vpop.f32.mrb[0].mxu0
        %v1570 = vadd.f32 0.0, %v1569
        %1571 = vmatprep.mubr.f32.mxu0 %v1358
        %1572 = vmatmul.mubr.f32.gmra.mrb[0].mxu0 %v1279
        %v1573 = vpop.f32.mrb[0].mxu0
        %v1574 = vadd.f32 0.0, %v1573
        %v1575 = vpop.f32.mrb[0].mxu0
        %v1576 = vadd.f32 0.0, %v1575
        %1577 = vmatprep.mubr.f32.mxu0 %v1361
        %1578 = vmatmul.mubr.f32.gmra.mrb[0].mxu0 %v1281
        %v1579 = vpop.f32.mrb[0].mxu0
        %v1580 = vadd.f32 0.0, %v1579
        %v1581 = vpop.f32.mrb[0].mxu0
        %v1582 = vadd.f32 0.0, %v1581
        %1583 = vmatprep.mubr.f32.mxu0 %v1364
        %1584 = vmatmul.mubr.f32.gmra.mrb[0].mxu0 %v1283
        %v1585 = vpop.f32.mrb[0].mxu0
        %v1586 = vadd.f32 0.0, %v1585
        %v1587 = vpop.f32.mrb[0].mxu0
        %v1588 = vadd.f32 0.0, %v1587
        %1589 = vmatprep.mubr.f32.mxu0 %v1367
        %1590 = vmatmul.mubr.f32.gmra.mrb[0].mxu0 %v1285
        %v1591 = vpop.f32.mrb[0].mxu0
        %v1592 = vadd.f32 0.0, %v1591
        %v1593 = vpop.f32.mrb[0].mxu0
        %v1594 = vadd.f32 0.0, %v1593
        %1595 = vmatprep.mubr.f32.mxu0 %v1370
        %1596 = vmatmul.mubr.f32.gmra.mrb[0].mxu0 %v1287
        %v1597 = vpop.f32.mrb[0].mxu0
        %v1598 = vadd.f32 0.0, %v1597
        %v1599 = vpop.f32.mrb[0].mxu0
        %v1600 = vadd.f32 0.0, %v1599
        %1601 = vmatprep.mubr.f32.mxu0 %v1373
        %1602 = vmatmul.mubr.f32.gmra.mrb[0].mxu0 %v1289
        %v1603 = vpop.f32.mrb[0].mxu0
        %v1604 = vadd.f32 0.0, %v1603
        %v1605 = vpop.f32.mrb[0].mxu0
        %v1606 = vadd.f32 0.0, %v1605
        %1607 = vdwg.mxu0
        %1608 = vst [vmem:[%s188] sm:$0xff] %v1442
        %1609 = vst.msk [vmem:[%s188 + $0x8] sm:$0xff] %vm413, %v1444
        %1610 = vst [vmem:[%s188 + $0x10] sm:$0xff] %v1448
        %1611 = vst.msk [vmem:[%s188 + $0x18] sm:$0xff] %vm413, %v1450
        %1612 = vst [vmem:[%s188 + $0x20] sm:$0xff] %v1454
        %1613 = vst.msk [vmem:[%s188 + $0x28] sm:$0xff] %vm413, %v1456
        %1614 = vst [vmem:[%s188 + $0x30] sm:$0xff] %v1460
        %1615 = vst.msk [vmem:[%s188 + $0x38] sm:$0xff] %vm413, %v1462
        %1616 = vst [vmem:[%s188 + $0x40] sm:$0xff] %v1466
        %1617 = vst.msk [vmem:[%s188 + $0x48] sm:$0xff] %vm413, %v1468
        %1618 = vst [vmem:[%s188 + $0x50] sm:$0xff] %v1472
        %1619 = vst.msk [vmem:[%s188 + $0x58] sm:$0xff] %vm413, %v1474
        %1620 = vst [vmem:[%s188 + $0x60] sm:$0xff] %v1478
        %1621 = vst.msk [vmem:[%s188 + $0x68] sm:$0xff] %vm413, %v1480
        %1622 = vst [vmem:[%s188 + $0x70] sm:$0xff] %v1484
        %1623 = vst.msk [vmem:[%s188 + $0x78] sm:$0xff] %vm413, %v1486
        %1624 = vst [vmem:[%s188 + $0x80] sm:$0xff] %v1490
        %1625 = vst.msk [vmem:[%s188 + $0x88] sm:$0xff] %vm413, %v1492
        %1626 = vst [vmem:[%s188 + $0x90] sm:$0xff] %v1496
        %1627 = vst.msk [vmem:[%s188 + $0x98] sm:$0xff] %vm413, %v1498
        %1628 = vst [vmem:[%s188 + $0xa0] sm:$0xff] %v1502
        %1629 = vst.msk [vmem:[%s188 + $0xa8] sm:$0xff] %vm413, %v1504
        %1630 = vst [vmem:[%s188 + $0xb0] sm:$0xff] %v1508
        %1631 = vst.msk [vmem:[%s188 + $0xb8] sm:$0xff] %vm413, %v1510
        %1632 = vst [vmem:[%s188 + $0xc0] sm:$0xff] %v1514
        %1633 = vst.msk [vmem:[%s188 + $0xc8] sm:$0xff] %vm413, %v1516
        %1634 = vst [vmem:[%s188 + $0xd0] sm:$0xff] %v1520
        %1635 = vst.msk [vmem:[%s188 + $0xd8] sm:$0xff] %vm413, %v1522
        %1636 = vst [vmem:[%s188 + $0xe0] sm:$0xff] %v1526
        %1637 = vst.msk [vmem:[%s188 + $0xe8] sm:$0xff] %vm413, %v1528
        %1638 = vst [vmem:[%s188 + $0xf0] sm:$0xff] %v1532
        %1639 = vst.msk [vmem:[%s188 + $0xf8] sm:$0xff] %vm413, %v1534
        %1640 = vst [vmem:[%s188 + $0x100] sm:$0xff] %v1538
        %1641 = vst.msk [vmem:[%s188 + $0x108] sm:$0xff] %vm413, %v1540
        %1642 = vst [vmem:[%s188 + $0x110] sm:$0xff] %v1544
        %1643 = vst.msk [vmem:[%s188 + $0x118] sm:$0xff] %vm413, %v1546
        %1644 = vst [vmem:[%s188 + $0x120] sm:$0xff] %v1550
        %1645 = vst.msk [vmem:[%s188 + $0x128] sm:$0xff] %vm413, %v1552
        %1646 = vst [vmem:[%s188 + $0x130] sm:$0xff] %v1556
        %1647 = vst.msk [vmem:[%s188 + $0x138] sm:$0xff] %vm413, %v1558
        %1648 = vst [vmem:[%s188 + $0x140] sm:$0xff] %v1562
        %1649 = vst.msk [vmem:[%s188 + $0x148] sm:$0xff] %vm413, %v1564
        %1650 = vst [vmem:[%s188 + $0x150] sm:$0xff] %v1568
        %1651 = vst.msk [vmem:[%s188 + $0x158] sm:$0xff] %vm413, %v1570
        %1652 = vst [vmem:[%s188 + $0x160] sm:$0xff] %v1574
        %1653 = vst.msk [vmem:[%s188 + $0x168] sm:$0xff] %vm413, %v1576
        %1654 = vst [vmem:[%s188 + $0x170] sm:$0xff] %v1580
        %1655 = vst.msk [vmem:[%s188 + $0x178] sm:$0xff] %vm413, %v1582
        %1656 = vst [vmem:[%s188 + $0x180] sm:$0xff] %v1586
        %1657 = vst.msk [vmem:[%s188 + $0x188] sm:$0xff] %vm413, %v1588
        %1658 = vst [vmem:[%s188 + $0x190] sm:$0xff] %v1592
        %1659 = vst.msk [vmem:[%s188 + $0x198] sm:$0xff] %vm413, %v1594
        %1660 = vst [vmem:[%s188 + $0x1a0] sm:$0xff] %v1598
        %1661 = vst.msk [vmem:[%s188 + $0x1a8] sm:$0xff] %vm413, %v1600
        %1662 = vst [vmem:[%s188 + $0x1b0] sm:$0xff] %v1604
        %1663 = vst.msk [vmem:[%s188 + $0x1b8] sm:$0xff] %vm413, %v1606
        %v1664 = vld [vmem:[%s2] sm:$0xff]
        %v1665 = vld [vmem:[%s2 + $0x8] sm:$0xff]
        %v1666 = vld [vmem:[%s2 + $0x10] sm:$0xff]
        %v1667 = vld [vmem:[%s2 + $0x18] sm:$0xff]
        %v1668 = vld [vmem:[%s2 + $0x20] sm:$0xff]
        %v1669 = vld [vmem:[%s2 + $0x28] sm:$0xff]
        %v1670 = vld [vmem:[%s2 + $0x30] sm:$0xff]
        %v1671 = vld [vmem:[%s2 + $0x38] sm:$0xff]
        %v1672 = vld [vmem:[%s2 + $0x40] sm:$0xff]
        %v1673 = vld [vmem:[%s2 + $0x48] sm:$0xff]
        %v1674 = vld [vmem:[%s2 + $0x50] sm:$0xff]
        %v1675 = vld [vmem:[%s2 + $0x58] sm:$0xff]
        %v1676 = vld [vmem:[%s2 + $0x60] sm:$0xff]
        %v1677 = vld [vmem:[%s2 + $0x68] sm:$0xff]
        %v1678 = vld [vmem:[%s2 + $0x70] sm:$0xff]
        %v1679 = vld [vmem:[%s2 + $0x78] sm:$0xff]
        %v1680 = vld [vmem:[%s2 + $0x80] sm:$0xff]
        %v1681 = vld [vmem:[%s2 + $0x88] sm:$0xff]
        %v1682 = vld [vmem:[%s2 + $0x90] sm:$0xff]
        %v1683 = vld [vmem:[%s2 + $0x98] sm:$0xff]
        %v1684 = vld [vmem:[%s2 + $0xa0] sm:$0xff]
        %v1685 = vld [vmem:[%s2 + $0xa8] sm:$0xff]
        %v1686 = vld [vmem:[%s2 + $0xb0] sm:$0xff]
        %v1687 = vld [vmem:[%s2 + $0xb8] sm:$0xff]
        %v1688 = vld [vmem:[%s2 + $0xc0] sm:$0xff]
        %v1689 = vld [vmem:[%s2 + $0xc8] sm:$0xff]
        %v1690 = vld [vmem:[%s2 + $0xd0] sm:$0xff]
        %v1691 = vld [vmem:[%s2 + $0xd8] sm:$0xff]
        %v1692 = vld [vmem:[%s2 + $0xe0] sm:$0xff]
        %v1693 = vld [vmem:[%s2 + $0xe8] sm:$0xff]
        %v1694 = vld [vmem:[%s2 + $0xf0] sm:$0xff]
        %v1695 = vld [vmem:[%s2 + $0xf8] sm:$0xff]
        %v1696 = vld [vmem:[%s2 + $0x100] sm:$0xff]
        %v1697 = vld [vmem:[%s2 + $0x108] sm:$0xff]
        %v1698 = vld [vmem:[%s2 + $0x110] sm:$0xff]
        %v1699 = vld [vmem:[%s2 + $0x118] sm:$0xff]
        %v1700 = vld [vmem:[%s2 + $0x120] sm:$0xff]
        %v1701 = vld [vmem:[%s2 + $0x128] sm:$0xff]
        %v1702 = vld [vmem:[%s2 + $0x130] sm:$0xff]
        %v1703 = vld [vmem:[%s2 + $0x138] sm:$0xff]
        %v1704 = vld [vmem:[%s2 + $0x140] sm:$0xff]
        %v1705 = vld [vmem:[%s2 + $0x148] sm:$0xff]
        %v1706 = vld [vmem:[%s2 + $0x150] sm:$0xff]
        %v1707 = vld [vmem:[%s2 + $0x158] sm:$0xff]
        %v1708 = vld [vmem:[%s2 + $0x160] sm:$0xff]
        %v1709 = vld [vmem:[%s2 + $0x168] sm:$0xff]
        %v1710 = vld [vmem:[%s2 + $0x170] sm:$0xff]
        %v1711 = vld [vmem:[%s2 + $0x178] sm:$0xff]
        %v1712 = vld [vmem:[%s2 + $0x180] sm:$0xff]
        %v1713 = vld [vmem:[%s2 + $0x188] sm:$0xff]
        %v1714 = vld [vmem:[%s2 + $0x190] sm:$0xff]
        %v1715 = vld [vmem:[%s2 + $0x198] sm:$0xff]
        %v1716 = vld [vmem:[%s2 + $0x1a0] sm:$0xff]
        %v1717 = vld [vmem:[%s2 + $0x1a8] sm:$0xff]
        %v1718 = vld [vmem:[%s2 + $0x1b0] sm:$0xff]
        %v1719 = vld [vmem:[%s2 + $0x1b8] sm:$0xff]
        %v1721 = vsel %vm413, %v1665, 0
        %v1724 = vsel %vm413, %v1667, 0
        %v1727 = vsel %vm413, %v1669, 0
        %v1730 = vsel %vm413, %v1671, 0
        %v1733 = vsel %vm413, %v1673, 0
        %v1736 = vsel %vm413, %v1675, 0
        %v1739 = vsel %vm413, %v1677, 0
        %v1742 = vsel %vm413, %v1679, 0
        %v1745 = vsel %vm413, %v1681, 0
        %v1748 = vsel %vm413, %v1683, 0
        %v1751 = vsel %vm413, %v1685, 0
        %v1754 = vsel %vm413, %v1687, 0
        %v1757 = vsel %vm413, %v1689, 0
        %v1760 = vsel %vm413, %v1691, 0
        %v1763 = vsel %vm413, %v1693, 0
        %v1766 = vsel %vm413, %v1695, 0
        %v1769 = vsel %vm413, %v1697, 0
        %v1772 = vsel %vm413, %v1699, 0
        %v1775 = vsel %vm413, %v1701, 0
        %v1778 = vsel %vm413, %v1703, 0
        %v1781 = vsel %vm413, %v1705, 0
        %v1784 = vsel %vm413, %v1707, 0
        %v1787 = vsel %vm413, %v1709, 0
        %v1790 = vsel %vm413, %v1711, 0
        %v1793 = vsel %vm413, %v1713, 0
        %v1796 = vsel %vm413, %v1715, 0
        %v1799 = vsel %vm413, %v1717, 0
        %v1802 = vsel %vm413, %v1719, 0
        %1804 = vmatprep.subr.mxu0 %v903
        %1805 = vmatpush1.msra.mxu0 %v901
        %1806 = vmatprep.subr.mxu0 %v909
        %1807 = vmatpush1.msra.mxu0 %v907
        %1808 = vmatprep.subr.mxu0 %v915
        %1809 = vmatpush1.msra.mxu0 %v913
        %1810 = vmatprep.subr.mxu0 %v921
        %1811 = vmatpush1.msra.mxu0 %v919
        %1812 = vmatprep.subr.mxu0 %v927
        %1813 = vmatpush1.msra.mxu0 %v925
        %1814 = vmatprep.subr.mxu0 %v933
        %1815 = vmatpush1.msra.mxu0 %v931
        %1816 = vmatprep.subr.mxu0 %v939
        %1817 = vmatpush1.msra.mxu0 %v937
        %1818 = vmatprep.subr.mxu0 %v945
        %1819 = vmatpush1.msra.mxu0 %v943
        %1820 = vmatprep.subr.mxu0 %v951
        %1821 = vmatpush1.msra.mxu0 %v949
        %1822 = vmatprep.subr.mxu0 %v957
        %1823 = vmatpush1.msra.mxu0 %v955
        %1824 = vmatprep.subr.mxu0 %v963
        %1825 = vmatpush1.msra.mxu0 %v961
        %1826 = vmatprep.subr.mxu0 %v969
        %1827 = vmatpush1.msra.mxu0 %v967
        %1828 = vmatprep.subr.mxu0 %v975
        %1829 = vmatpush1.msra.mxu0 %v973
        %1830 = vmatprep.subr.mxu0 %v981
        %1831 = vmatpush1.msra.mxu0 %v979
        %1832 = vmatprep.subr.mxu0 %v987
        %1833 = vmatpush1.msra.mxu0 %v985
        %1834 = vmatprep.subr.mxu0 %v993
        %1835 = vmatpush1.msra.mxu0 %v991
        %1836 = vmatprep.subr.mxu0 %v999
        %1837 = vmatpush1.msra.mxu0 %v997
        %1838 = vmatprep.subr.mxu0 %v1005
        %1839 = vmatpush1.msra.mxu0 %v1003
        %1840 = vmatprep.subr.mxu0 %v1011
        %1841 = vmatpush1.msra.mxu0 %v1009
        %1842 = vmatprep.subr.mxu0 %v1017
        %1843 = vmatpush1.msra.mxu0 %v1015
        %1844 = vmatprep.subr.mxu0 %v1023
        %1845 = vmatpush1.msra.mxu0 %v1021
        %1846 = vmatprep.subr.mxu0 %v1029
        %1847 = vmatpush1.msra.mxu0 %v1027
        %1848 = vmatprep.subr.mxu0 %v1035
        %1849 = vmatpush1.msra.mxu0 %v1033
        %1850 = vmatprep.subr.mxu0 %v1041
        %1851 = vmatpush1.msra.mxu0 %v1039
        %1852 = vmatprep.subr.mxu0 %v1047
        %1853 = vmatpush1.msra.mxu0 %v1045
        %1854 = vmatprep.subr.mxu0 %v1053
        %1855 = vmatpush1.msra.mxu0 %v1051
        %1856 = vmatprep.subr.mxu0 %v1059
        %1857 = vmatpush1.msra.mxu0 %v1057
        %1858 = vmatprep.subr.mxu0 %v1065
        %1859 = vmatpush1.msra.mxu0 %v1063
        %1860 = vmatprep.subr.mxu0 0.0
        %1861 = vmatpush1.msra.mxu0 0.0
        %1862 = vmatprep.subr.mxu0 0.0
        %1863 = vmatpush1.msra.mxu0 0.0
        %1864 = vmatprep.subr.mxu0 0.0
        %1865 = vmatpush1.msra.mxu0 0.0
        %1866 = vmatprep.subr.mxu0 0.0
        %1867 = vmatpush1.msra.mxu0 0.0
        %1868 = vmatprep.mubr.f32.mxu0 %v1721
        %1869 = vmatmul.mubr.f32.gmra.mrb[0].mxu0 %v1664
        %v1870 = vpop.f32.mrb[0].mxu0
        %v1871 = vadd.f32 0.0, %v1870
        %v1872 = vpop.f32.mrb[0].mxu0
        %v1873 = vadd.f32 0.0, %v1872
        %1874 = vmatprep.mubr.f32.mxu0 %v1724
        %1875 = vmatmul.mubr.f32.gmra.mrb[0].mxu0 %v1666
        %v1876 = vpop.f32.mrb[0].mxu0
        %v1877 = vadd.f32 0.0, %v1876
        %v1878 = vpop.f32.mrb[0].mxu0
        %v1879 = vadd.f32 0.0, %v1878
        %1880 = vmatprep.mubr.f32.mxu0 %v1727
        %1881 = vmatmul.mubr.f32.gmra.mrb[0].mxu0 %v1668
        %v1882 = vpop.f32.mrb[0].mxu0
        %v1883 = vadd.f32 0.0, %v1882
        %v1884 = vpop.f32.mrb[0].mxu0
        %v1885 = vadd.f32 0.0, %v1884
        %1886 = vmatprep.mubr.f32.mxu0 %v1730
        %1887 = vmatmul.mubr.f32.gmra.mrb[0].mxu0 %v1670
        %v1888 = vpop.f32.mrb[0].mxu0
        %v1889 = vadd.f32 0.0, %v1888
        %v1890 = vpop.f32.mrb[0].mxu0
        %v1891 = vadd.f32 0.0, %v1890
        %1892 = vmatprep.mubr.f32.mxu0 %v1733
        %1893 = vmatmul.mubr.f32.gmra.mrb[0].mxu0 %v1672
        %v1894 = vpop.f32.mrb[0].mxu0
        %v1895 = vadd.f32 0.0, %v1894
        %v1896 = vpop.f32.mrb[0].mxu0
        %v1897 = vadd.f32 0.0, %v1896
        %1898 = vmatprep.mubr.f32.mxu0 %v1736
        %1899 = vmatmul.mubr.f32.gmra.mrb[0].mxu0 %v1674
        %v1900 = vpop.f32.mrb[0].mxu0
        %v1901 = vadd.f32 0.0, %v1900
        %v1902 = vpop.f32.mrb[0].mxu0
        %v1903 = vadd.f32 0.0, %v1902
        %1904 = vmatprep.mubr.f32.mxu0 %v1739
        %1905 = vmatmul.mubr.f32.gmra.mrb[0].mxu0 %v1676
        %v1906 = vpop.f32.mrb[0].mxu0
        %v1907 = vadd.f32 0.0, %v1906
        %v1908 = vpop.f32.mrb[0].mxu0
        %v1909 = vadd.f32 0.0, %v1908
        %1910 = vmatprep.mubr.f32.mxu0 %v1742
        %1911 = vmatmul.mubr.f32.gmra.mrb[0].mxu0 %v1678
        %v1912 = vpop.f32.mrb[0].mxu0
        %v1913 = vadd.f32 0.0, %v1912
        %v1914 = vpop.f32.mrb[0].mxu0
        %v1915 = vadd.f32 0.0, %v1914
        %1916 = vmatprep.mubr.f32.mxu0 %v1745
        %1917 = vmatmul.mubr.f32.gmra.mrb[0].mxu0 %v1680
        %v1918 = vpop.f32.mrb[0].mxu0
        %v1919 = vadd.f32 0.0, %v1918
        %v1920 = vpop.f32.mrb[0].mxu0
        %v1921 = vadd.f32 0.0, %v1920
        %1922 = vmatprep.mubr.f32.mxu0 %v1748
        %1923 = vmatmul.mubr.f32.gmra.mrb[0].mxu0 %v1682
        %v1924 = vpop.f32.mrb[0].mxu0
        %v1925 = vadd.f32 0.0, %v1924
        %v1926 = vpop.f32.mrb[0].mxu0
        %v1927 = vadd.f32 0.0, %v1926
        %1928 = vmatprep.mubr.f32.mxu0 %v1751
        %1929 = vmatmul.mubr.f32.gmra.mrb[0].mxu0 %v1684
        %v1930 = vpop.f32.mrb[0].mxu0
        %v1931 = vadd.f32 0.0, %v1930
        %v1932 = vpop.f32.mrb[0].mxu0
        %v1933 = vadd.f32 0.0, %v1932
        %1934 = vmatprep.mubr.f32.mxu0 %v1754
        %1935 = vmatmul.mubr.f32.gmra.mrb[0].mxu0 %v1686
        %v1936 = vpop.f32.mrb[0].mxu0
        %v1937 = vadd.f32 0.0, %v1936
        %v1938 = vpop.f32.mrb[0].mxu0
        %v1939 = vadd.f32 0.0, %v1938
        %1940 = vmatprep.mubr.f32.mxu0 %v1757
        %1941 = vmatmul.mubr.f32.gmra.mrb[0].mxu0 %v1688
        %v1942 = vpop.f32.mrb[0].mxu0
        %v1943 = vadd.f32 0.0, %v1942
        %v1944 = vpop.f32.mrb[0].mxu0
        %v1945 = vadd.f32 0.0, %v1944
        %1946 = vmatprep.mubr.f32.mxu0 %v1760
        %1947 = vmatmul.mubr.f32.gmra.mrb[0].mxu0 %v1690
        %v1948 = vpop.f32.mrb[0].mxu0
        %v1949 = vadd.f32 0.0, %v1948
        %v1950 = vpop.f32.mrb[0].mxu0
        %v1951 = vadd.f32 0.0, %v1950
        %1952 = vmatprep.mubr.f32.mxu0 %v1763
        %1953 = vmatmul.mubr.f32.gmra.mrb[0].mxu0 %v1692
        %v1954 = vpop.f32.mrb[0].mxu0
        %v1955 = vadd.f32 0.0, %v1954
        %v1956 = vpop.f32.mrb[0].mxu0
        %v1957 = vadd.f32 0.0, %v1956
        %1958 = vmatprep.mubr.f32.mxu0 %v1766
        %1959 = vmatmul.mubr.f32.gmra.mrb[0].mxu0 %v1694
        %v1960 = vpop.f32.mrb[0].mxu0
        %v1961 = vadd.f32 0.0, %v1960
        %v1962 = vpop.f32.mrb[0].mxu0
        %v1963 = vadd.f32 0.0, %v1962
        %1964 = vmatprep.mubr.f32.mxu0 %v1769
        %1965 = vmatmul.mubr.f32.gmra.mrb[0].mxu0 %v1696
        %v1966 = vpop.f32.mrb[0].mxu0
        %v1967 = vadd.f32 0.0, %v1966
        %v1968 = vpop.f32.mrb[0].mxu0
        %v1969 = vadd.f32 0.0, %v1968
        %1970 = vmatprep.mubr.f32.mxu0 %v1772
        %1971 = vmatmul.mubr.f32.gmra.mrb[0].mxu0 %v1698
        %v1972 = vpop.f32.mrb[0].mxu0
        %v1973 = vadd.f32 0.0, %v1972
        %v1974 = vpop.f32.mrb[0].mxu0
        %v1975 = vadd.f32 0.0, %v1974
        %1976 = vmatprep.mubr.f32.mxu0 %v1775
        %1977 = vmatmul.mubr.f32.gmra.mrb[0].mxu0 %v1700
        %v1978 = vpop.f32.mrb[0].mxu0
        %v1979 = vadd.f32 0.0, %v1978
        %v1980 = vpop.f32.mrb[0].mxu0
        %v1981 = vadd.f32 0.0, %v1980
        %1982 = vmatprep.mubr.f32.mxu0 %v1778
        %1983 = vmatmul.mubr.f32.gmra.mrb[0].mxu0 %v1702
        %v1984 = vpop.f32.mrb[0].mxu0
        %v1985 = vadd.f32 0.0, %v1984
        %v1986 = vpop.f32.mrb[0].mxu0
        %v1987 = vadd.f32 0.0, %v1986
        %1988 = vmatprep.mubr.f32.mxu0 %v1781
        %1989 = vmatmul.mubr.f32.gmra.mrb[0].mxu0 %v1704
        %v1990 = vpop.f32.mrb[0].mxu0
        %v1991 = vadd.f32 0.0, %v1990
        %v1992 = vpop.f32.mrb[0].mxu0
        %v1993 = vadd.f32 0.0, %v1992
        %1994 = vmatprep.mubr.f32.mxu0 %v1784
        %1995 = vmatmul.mubr.f32.gmra.mrb[0].mxu0 %v1706
        %v1996 = vpop.f32.mrb[0].mxu0
        %v1997 = vadd.f32 0.0, %v1996
        %v1998 = vpop.f32.mrb[0].mxu0
        %v1999 = vadd.f32 0.0, %v1998
        %2000 = vmatprep.mubr.f32.mxu0 %v1787
        %2001 = vmatmul.mubr.f32.gmra.mrb[0].mxu0 %v1708
        %v2002 = vpop.f32.mrb[0].mxu0
        %v2003 = vadd.f32 0.0, %v2002
        %v2004 = vpop.f32.mrb[0].mxu0
        %v2005 = vadd.f32 0.0, %v2004
        %2006 = vmatprep.mubr.f32.mxu0 %v1790
        %2007 = vmatmul.mubr.f32.gmra.mrb[0].mxu0 %v1710
        %v2008 = vpop.f32.mrb[0].mxu0
        %v2009 = vadd.f32 0.0, %v2008
        %v2010 = vpop.f32.mrb[0].mxu0
        %v2011 = vadd.f32 0.0, %v2010
        %2012 = vmatprep.mubr.f32.mxu0 %v1793
        %2013 = vmatmul.mubr.f32.gmra.mrb[0].mxu0 %v1712
        %v2014 = vpop.f32.mrb[0].mxu0
        %v2015 = vadd.f32 0.0, %v2014
        %v2016 = vpop.f32.mrb[0].mxu0
        %v2017 = vadd.f32 0.0, %v2016
        %2018 = vmatprep.mubr.f32.mxu0 %v1796
        %2019 = vmatmul.mubr.f32.gmra.mrb[0].mxu0 %v1714
        %v2020 = vpop.f32.mrb[0].mxu0
        %v2021 = vadd.f32 0.0, %v2020
        %v2022 = vpop.f32.mrb[0].mxu0
        %v2023 = vadd.f32 0.0, %v2022
        %2024 = vmatprep.mubr.f32.mxu0 %v1799
        %2025 = vmatmul.mubr.f32.gmra.mrb[0].mxu0 %v1716
        %v2026 = vpop.f32.mrb[0].mxu0
        %v2027 = vadd.f32 0.0, %v2026
        %v2028 = vpop.f32.mrb[0].mxu0
        %v2029 = vadd.f32 0.0, %v2028
        %2030 = vmatprep.mubr.f32.mxu0 %v1802
        %2031 = vmatmul.mubr.f32.gmra.mrb[0].mxu0 %v1718
        %v2032 = vpop.f32.mrb[0].mxu0
        %v2033 = vadd.f32 0.0, %v2032
        %v2034 = vpop.f32.mrb[0].mxu0
        %v2035 = vadd.f32 0.0, %v2034
        %2036 = vdwg.mxu0
        %2037 = vst [vmem:[%s188 + $0x1c0] sm:$0xff] %v1871
        %2038 = vst.msk [vmem:[%s188 + $0x1c8] sm:$0xff] %vm413, %v1873
        %2039 = vst [vmem:[%s188 + $0x1d0] sm:$0xff] %v1877
        %2040 = vst.msk [vmem:[%s188 + $0x1d8] sm:$0xff] %vm413, %v1879
        %2041 = vst [vmem:[%s188 + $0x1e0] sm:$0xff] %v1883
        %2042 = vst.msk [vmem:[%s188 + $0x1e8] sm:$0xff] %vm413, %v1885
        %2043 = vst [vmem:[%s188 + $0x1f0] sm:$0xff] %v1889
        %2044 = vst.msk [vmem:[%s188 + $0x1f8] sm:$0xff] %vm413, %v1891
        %2045 = vst [vmem:[%s188 + $0x200] sm:$0xff] %v1895
        %2046 = vst.msk [vmem:[%s188 + $0x208] sm:$0xff] %vm413, %v1897
        %2047 = vst [vmem:[%s188 + $0x210] sm:$0xff] %v1901
        %2048 = vst.msk [vmem:[%s188 + $0x218] sm:$0xff] %vm413, %v1903
        %2049 = vst [vmem:[%s188 + $0x220] sm:$0xff] %v1907
        %2050 = vst.msk [vmem:[%s188 + $0x228] sm:$0xff] %vm413, %v1909
        %2051 = vst [vmem:[%s188 + $0x230] sm:$0xff] %v1913
        %2052 = vst.msk [vmem:[%s188 + $0x238] sm:$0xff] %vm413, %v1915
        %2053 = vst [vmem:[%s188 + $0x240] sm:$0xff] %v1919
        %2054 = vst.msk [vmem:[%s188 + $0x248] sm:$0xff] %vm413, %v1921
        %2055 = vst [vmem:[%s188 + $0x250] sm:$0xff] %v1925
        %2056 = vst.msk [vmem:[%s188 + $0x258] sm:$0xff] %vm413, %v1927
        %2057 = vst [vmem:[%s188 + $0x260] sm:$0xff] %v1931
        %2058 = vst.msk [vmem:[%s188 + $0x268] sm:$0xff] %vm413, %v1933
        %2059 = vst [vmem:[%s188 + $0x270] sm:$0xff] %v1937
        %2060 = vst.msk [vmem:[%s188 + $0x278] sm:$0xff] %vm413, %v1939
        %2061 = vst [vmem:[%s188 + $0x280] sm:$0xff] %v1943
        %2062 = vst.msk [vmem:[%s188 + $0x288] sm:$0xff] %vm413, %v1945
        %2063 = vst [vmem:[%s188 + $0x290] sm:$0xff] %v1949
        %2064 = vst.msk [vmem:[%s188 + $0x298] sm:$0xff] %vm413, %v1951
        %2065 = vst [vmem:[%s188 + $0x2a0] sm:$0xff] %v1955
        %2066 = vst.msk [vmem:[%s188 + $0x2a8] sm:$0xff] %vm413, %v1957
        %2067 = vst [vmem:[%s188 + $0x2b0] sm:$0xff] %v1961
        %2068 = vst.msk [vmem:[%s188 + $0x2b8] sm:$0xff] %vm413, %v1963
        %2069 = vst [vmem:[%s188 + $0x2c0] sm:$0xff] %v1967
        %2070 = vst.msk [vmem:[%s188 + $0x2c8] sm:$0xff] %vm413, %v1969
        %2071 = vst [vmem:[%s188 + $0x2d0] sm:$0xff] %v1973
        %2072 = vst.msk [vmem:[%s188 + $0x2d8] sm:$0xff] %vm413, %v1975
        %2073 = vst [vmem:[%s188 + $0x2e0] sm:$0xff] %v1979
        %2074 = vst.msk [vmem:[%s188 + $0x2e8] sm:$0xff] %vm413, %v1981
        %2075 = vst [vmem:[%s188 + $0x2f0] sm:$0xff] %v1985
        %2076 = vst.msk [vmem:[%s188 + $0x2f8] sm:$0xff] %vm413, %v1987
        %2077 = vst [vmem:[%s188 + $0x300] sm:$0xff] %v1991
        %2078 = vst.msk [vmem:[%s188 + $0x308] sm:$0xff] %vm413, %v1993
        %2079 = vst [vmem:[%s188 + $0x310] sm:$0xff] %v1997
        %2080 = vst.msk [vmem:[%s188 + $0x318] sm:$0xff] %vm413, %v1999
        %2081 = vst [vmem:[%s188 + $0x320] sm:$0xff] %v2003
        %2082 = vst.msk [vmem:[%s188 + $0x328] sm:$0xff] %vm413, %v2005
        %2083 = vst [vmem:[%s188 + $0x330] sm:$0xff] %v2009
        %2084 = vst.msk [vmem:[%s188 + $0x338] sm:$0xff] %vm413, %v2011
        %2085 = vst [vmem:[%s188 + $0x340] sm:$0xff] %v2015
        %2086 = vst.msk [vmem:[%s188 + $0x348] sm:$0xff] %vm413, %v2017
        %2087 = vst [vmem:[%s188 + $0x350] sm:$0xff] %v2021
        %2088 = vst.msk [vmem:[%s188 + $0x358] sm:$0xff] %vm413, %v2023
        %2089 = vst [vmem:[%s188 + $0x360] sm:$0xff] %v2027
        %2090 = vst.msk [vmem:[%s188 + $0x368] sm:$0xff] %vm413, %v2029
        %2091 = vst [vmem:[%s188 + $0x370] sm:$0xff] %v2033
        %2092 = vst.msk [vmem:[%s188 + $0x378] sm:$0xff] %vm413, %v2035
        %v2093 = vld [vmem:[%s2] sm:$0xff]
        %v2094 = vld [vmem:[%s2 + $0x8] sm:$0xff]
        %v2095 = vld [vmem:[%s2 + $0x10] sm:$0xff]
        %v2096 = vld [vmem:[%s2 + $0x18] sm:$0xff]
        %v2097 = vld [vmem:[%s2 + $0x20] sm:$0xff]
        %v2098 = vld [vmem:[%s2 + $0x28] sm:$0xff]
        %v2099 = vld [vmem:[%s2 + $0x30] sm:$0xff]
        %v2100 = vld [vmem:[%s2 + $0x38] sm:$0xff]
        %v2101 = vld [vmem:[%s2 + $0x40] sm:$0xff]
        %v2102 = vld [vmem:[%s2 + $0x48] sm:$0xff]
        %v2103 = vld [vmem:[%s2 + $0x50] sm:$0xff]
        %v2104 = vld [vmem:[%s2 + $0x58] sm:$0xff]
        %v2105 = vld [vmem:[%s2 + $0x60] sm:$0xff]
        %v2106 = vld [vmem:[%s2 + $0x68] sm:$0xff]
        %v2107 = vld [vmem:[%s2 + $0x70] sm:$0xff]
        %v2108 = vld [vmem:[%s2 + $0x78] sm:$0xff]
        %v2109 = vld [vmem:[%s2 + $0x80] sm:$0xff]
        %v2110 = vld [vmem:[%s2 + $0x88] sm:$0xff]
        %v2111 = vld [vmem:[%s2 + $0x90] sm:$0xff]
        %v2112 = vld [vmem:[%s2 + $0x98] sm:$0xff]
        %v2113 = vld [vmem:[%s2 + $0xa0] sm:$0xff]
        %v2114 = vld [vmem:[%s2 + $0xa8] sm:$0xff]
        %v2115 = vld [vmem:[%s2 + $0xb0] sm:$0xff]
        %v2116 = vld [vmem:[%s2 + $0xb8] sm:$0xff]
        %v2117 = vld [vmem:[%s2 + $0xc0] sm:$0xff]
        %v2118 = vld [vmem:[%s2 + $0xc8] sm:$0xff]
        %v2119 = vld [vmem:[%s2 + $0xd0] sm:$0xff]
        %v2120 = vld [vmem:[%s2 + $0xd8] sm:$0xff]
        %v2121 = vld [vmem:[%s2 + $0xe0] sm:$0xff]
        %v2122 = vld [vmem:[%s2 + $0xe8] sm:$0xff]
        %v2123 = vld [vmem:[%s2 + $0xf0] sm:$0xff]
        %v2124 = vld [vmem:[%s2 + $0xf8] sm:$0xff]
        %v2125 = vld [vmem:[%s2 + $0x100] sm:$0xff]
        %v2126 = vld [vmem:[%s2 + $0x108] sm:$0xff]
        %v2127 = vld [vmem:[%s2 + $0x110] sm:$0xff]
        %v2128 = vld [vmem:[%s2 + $0x118] sm:$0xff]
        %v2129 = vld [vmem:[%s2 + $0x120] sm:$0xff]
        %v2130 = vld [vmem:[%s2 + $0x128] sm:$0xff]
        %v2131 = vld [vmem:[%s2 + $0x130] sm:$0xff]
        %v2132 = vld [vmem:[%s2 + $0x138] sm:$0xff]
        %v2133 = vld [vmem:[%s2 + $0x140] sm:$0xff]
        %v2134 = vld [vmem:[%s2 + $0x148] sm:$0xff]
        %v2135 = vld [vmem:[%s2 + $0x150] sm:$0xff]
        %v2136 = vld [vmem:[%s2 + $0x158] sm:$0xff]
        %v2137 = vld [vmem:[%s2 + $0x160] sm:$0xff]
        %v2138 = vld [vmem:[%s2 + $0x168] sm:$0xff]
        %v2139 = vld [vmem:[%s2 + $0x170] sm:$0xff]
        %v2140 = vld [vmem:[%s2 + $0x178] sm:$0xff]
        %v2141 = vld [vmem:[%s2 + $0x180] sm:$0xff]
        %v2142 = vld [vmem:[%s2 + $0x188] sm:$0xff]
        %v2143 = vld [vmem:[%s2 + $0x190] sm:$0xff]
        %v2144 = vld [vmem:[%s2 + $0x198] sm:$0xff]
        %v2145 = vld [vmem:[%s2 + $0x1a0] sm:$0xff]
        %v2146 = vld [vmem:[%s2 + $0x1a8] sm:$0xff]
        %v2147 = vld [vmem:[%s2 + $0x1b0] sm:$0xff]
        %v2148 = vld [vmem:[%s2 + $0x1b8] sm:$0xff]
        %v2150 = vsel %vm413, %v2094, 0
        %v2153 = vsel %vm413, %v2096, 0
        %v2156 = vsel %vm413, %v2098, 0
        %v2159 = vsel %vm413, %v2100, 0
        %v2162 = vsel %vm413, %v2102, 0
        %v2165 = vsel %vm413, %v2104, 0
        %v2168 = vsel %vm413, %v2106, 0
        %v2171 = vsel %vm413, %v2108, 0
        %v2174 = vsel %vm413, %v2110, 0
        %v2177 = vsel %vm413, %v2112, 0
        %v2180 = vsel %vm413, %v2114, 0
        %v2183 = vsel %vm413, %v2116, 0
        %v2186 = vsel %vm413, %v2118, 0
        %v2189 = vsel %vm413, %v2120, 0
        %v2192 = vsel %vm413, %v2122, 0
        %v2195 = vsel %vm413, %v2124, 0
        %v2198 = vsel %vm413, %v2126, 0
        %v2201 = vsel %vm413, %v2128, 0
        %v2204 = vsel %vm413, %v2130, 0
        %v2207 = vsel %vm413, %v2132, 0
        %v2210 = vsel %vm413, %v2134, 0
        %v2213 = vsel %vm413, %v2136, 0
        %v2216 = vsel %vm413, %v2138, 0
        %v2219 = vsel %vm413, %v2140, 0
        %v2222 = vsel %vm413, %v2142, 0
        %v2225 = vsel %vm413, %v2144, 0
        %v2228 = vsel %vm413, %v2146, 0
        %v2231 = vsel %vm413, %v2148, 0
        %2233 = vmatprep.subr.mxu0 %v1071
        %2234 = vmatpush1.msra.mxu0 %v1069
        %2235 = vmatprep.subr.mxu0 %v1077
        %2236 = vmatpush1.msra.mxu0 %v1075
        %2237 = vmatprep.subr.mxu0 %v1083
        %2238 = vmatpush1.msra.mxu0 %v1081
        %2239 = vmatprep.subr.mxu0 %v1089
        %2240 = vmatpush1.msra.mxu0 %v1087
        %2241 = vmatprep.subr.mxu0 %v1095
        %2242 = vmatpush1.msra.mxu0 %v1093
        %2243 = vmatprep.subr.mxu0 %v1101
        %2244 = vmatpush1.msra.mxu0 %v1099
        %2245 = vmatprep.subr.mxu0 %v1107
        %2246 = vmatpush1.msra.mxu0 %v1105
        %2247 = vmatprep.subr.mxu0 %v1113
        %2248 = vmatpush1.msra.mxu0 %v1111
        %2249 = vmatprep.subr.mxu0 %v1119
        %2250 = vmatpush1.msra.mxu0 %v1117
        %2251 = vmatprep.subr.mxu0 %v1125
        %2252 = vmatpush1.msra.mxu0 %v1123
        %2253 = vmatprep.subr.mxu0 %v1131
        %2254 = vmatpush1.msra.mxu0 %v1129
        %2255 = vmatprep.subr.mxu0 %v1137
        %2256 = vmatpush1.msra.mxu0 %v1135
        %2257 = vmatprep.subr.mxu0 %v1143
        %2258 = vmatpush1.msra.mxu0 %v1141
        %2259 = vmatprep.subr.mxu0 %v1149
        %2260 = vmatpush1.msra.mxu0 %v1147
        %2261 = vmatprep.subr.mxu0 %v1155
        %2262 = vmatpush1.msra.mxu0 %v1153
        %2263 = vmatprep.subr.mxu0 %v1161
        %2264 = vmatpush1.msra.mxu0 %v1159
        %2265 = vmatprep.subr.mxu0 %v1167
        %2266 = vmatpush1.msra.mxu0 %v1165
        %2267 = vmatprep.subr.mxu0 %v1173
        %2268 = vmatpush1.msra.mxu0 %v1171
        %2269 = vmatprep.subr.mxu0 %v1179
        %2270 = vmatpush1.msra.mxu0 %v1177
        %2271 = vmatprep.subr.mxu0 %v1185
        %2272 = vmatpush1.msra.mxu0 %v1183
        %2273 = vmatprep.subr.mxu0 %v1191
        %2274 = vmatpush1.msra.mxu0 %v1189
        %2275 = vmatprep.subr.mxu0 %v1197
        %2276 = vmatpush1.msra.mxu0 %v1195
        %2277 = vmatprep.subr.mxu0 %v1203
        %2278 = vmatpush1.msra.mxu0 %v1201
        %2279 = vmatprep.subr.mxu0 %v1209
        %2280 = vmatpush1.msra.mxu0 %v1207
        %2281 = vmatprep.subr.mxu0 %v1215
        %2282 = vmatpush1.msra.mxu0 %v1213
        %2283 = vmatprep.subr.mxu0 %v1221
        %2284 = vmatpush1.msra.mxu0 %v1219
        %2285 = vmatprep.subr.mxu0 %v1227
        %2286 = vmatpush1.msra.mxu0 %v1225
        %2287 = vmatprep.subr.mxu0 %v1233
        %2288 = vmatpush1.msra.mxu0 %v1231
        %2289 = vmatprep.subr.mxu0 0.0
        %2290 = vmatpush1.msra.mxu0 0.0
        %2291 = vmatprep.subr.mxu0 0.0
        %2292 = vmatpush1.msra.mxu0 0.0
        %2293 = vmatprep.subr.mxu0 0.0
        %2294 = vmatpush1.msra.mxu0 0.0
        %2295 = vmatprep.subr.mxu0 0.0
        %2296 = vmatpush1.msra.mxu0 0.0
        %2297 = vmatprep.mubr.f32.mxu0 %v2150
        %2298 = vmatmul.mubr.f32.gmra.mrb[0].mxu0 %v2093
        %v2299 = vpop.f32.mrb[0].mxu0
        %v2300 = vadd.f32 0.0, %v2299
        %v2301 = vpop.f32.mrb[0].mxu0
        %v2302 = vadd.f32 0.0, %v2301
        %2303 = vmatprep.mubr.f32.mxu0 %v2153
        %2304 = vmatmul.mubr.f32.gmra.mrb[0].mxu0 %v2095
        %v2305 = vpop.f32.mrb[0].mxu0
        %v2306 = vadd.f32 0.0, %v2305
        %v2307 = vpop.f32.mrb[0].mxu0
        %v2308 = vadd.f32 0.0, %v2307
        %2309 = vmatprep.mubr.f32.mxu0 %v2156
        %2310 = vmatmul.mubr.f32.gmra.mrb[0].mxu0 %v2097
        %v2311 = vpop.f32.mrb[0].mxu0
        %v2312 = vadd.f32 0.0, %v2311
        %v2313 = vpop.f32.mrb[0].mxu0
        %v2314 = vadd.f32 0.0, %v2313
        %2315 = vmatprep.mubr.f32.mxu0 %v2159
        %2316 = vmatmul.mubr.f32.gmra.mrb[0].mxu0 %v2099
        %v2317 = vpop.f32.mrb[0].mxu0
        %v2318 = vadd.f32 0.0, %v2317
        %v2319 = vpop.f32.mrb[0].mxu0
        %v2320 = vadd.f32 0.0, %v2319
        %2321 = vmatprep.mubr.f32.mxu0 %v2162
        %2322 = vmatmul.mubr.f32.gmra.mrb[0].mxu0 %v2101
        %v2323 = vpop.f32.mrb[0].mxu0
        %v2324 = vadd.f32 0.0, %v2323
        %v2325 = vpop.f32.mrb[0].mxu0
        %v2326 = vadd.f32 0.0, %v2325
        %2327 = vmatprep.mubr.f32.mxu0 %v2165
        %2328 = vmatmul.mubr.f32.gmra.mrb[0].mxu0 %v2103
        %v2329 = vpop.f32.mrb[0].mxu0
        %v2330 = vadd.f32 0.0, %v2329
        %v2331 = vpop.f32.mrb[0].mxu0
        %v2332 = vadd.f32 0.0, %v2331
        %2333 = vmatprep.mubr.f32.mxu0 %v2168
        %2334 = vmatmul.mubr.f32.gmra.mrb[0].mxu0 %v2105
        %v2335 = vpop.f32.mrb[0].mxu0
        %v2336 = vadd.f32 0.0, %v2335
        %v2337 = vpop.f32.mrb[0].mxu0
        %v2338 = vadd.f32 0.0, %v2337
        %2339 = vmatprep.mubr.f32.mxu0 %v2171
        %2340 = vmatmul.mubr.f32.gmra.mrb[0].mxu0 %v2107
        %v2341 = vpop.f32.mrb[0].mxu0
        %v2342 = vadd.f32 0.0, %v2341
        %v2343 = vpop.f32.mrb[0].mxu0
        %v2344 = vadd.f32 0.0, %v2343
        %2345 = vmatprep.mubr.f32.mxu0 %v2174
        %2346 = vmatmul.mubr.f32.gmra.mrb[0].mxu0 %v2109
        %v2347 = vpop.f32.mrb[0].mxu0
        %v2348 = vadd.f32 0.0, %v2347
        %v2349 = vpop.f32.mrb[0].mxu0
        %v2350 = vadd.f32 0.0, %v2349
        %2351 = vmatprep.mubr.f32.mxu0 %v2177
        %2352 = vmatmul.mubr.f32.gmra.mrb[0].mxu0 %v2111
        %v2353 = vpop.f32.mrb[0].mxu0
        %v2354 = vadd.f32 0.0, %v2353
        %v2355 = vpop.f32.mrb[0].mxu0
        %v2356 = vadd.f32 0.0, %v2355
        %2357 = vmatprep.mubr.f32.mxu0 %v2180
        %2358 = vmatmul.mubr.f32.gmra.mrb[0].mxu0 %v2113
        %v2359 = vpop.f32.mrb[0].mxu0
        %v2360 = vadd.f32 0.0, %v2359
        %v2361 = vpop.f32.mrb[0].mxu0
        %v2362 = vadd.f32 0.0, %v2361
        %2363 = vmatprep.mubr.f32.mxu0 %v2183
        %2364 = vmatmul.mubr.f32.gmra.mrb[0].mxu0 %v2115
        %v2365 = vpop.f32.mrb[0].mxu0
        %v2366 = vadd.f32 0.0, %v2365
        %v2367 = vpop.f32.mrb[0].mxu0
        %v2368 = vadd.f32 0.0, %v2367
        %2369 = vmatprep.mubr.f32.mxu0 %v2186
        %2370 = vmatmul.mubr.f32.gmra.mrb[0].mxu0 %v2117
        %v2371 = vpop.f32.mrb[0].mxu0
        %v2372 = vadd.f32 0.0, %v2371
        %v2373 = vpop.f32.mrb[0].mxu0
        %v2374 = vadd.f32 0.0, %v2373
        %2375 = vmatprep.mubr.f32.mxu0 %v2189
        %2376 = vmatmul.mubr.f32.gmra.mrb[0].mxu0 %v2119
        %v2377 = vpop.f32.mrb[0].mxu0
        %v2378 = vadd.f32 0.0, %v2377
        %v2379 = vpop.f32.mrb[0].mxu0
        %v2380 = vadd.f32 0.0, %v2379
        %2381 = vmatprep.mubr.f32.mxu0 %v2192
        %2382 = vmatmul.mubr.f32.gmra.mrb[0].mxu0 %v2121
        %v2383 = vpop.f32.mrb[0].mxu0
        %v2384 = vadd.f32 0.0, %v2383
        %v2385 = vpop.f32.mrb[0].mxu0
        %v2386 = vadd.f32 0.0, %v2385
        %2387 = vmatprep.mubr.f32.mxu0 %v2195
        %2388 = vmatmul.mubr.f32.gmra.mrb[0].mxu0 %v2123
        %v2389 = vpop.f32.mrb[0].mxu0
        %v2390 = vadd.f32 0.0, %v2389
        %v2391 = vpop.f32.mrb[0].mxu0
        %v2392 = vadd.f32 0.0, %v2391
        %2393 = vmatprep.mubr.f32.mxu0 %v2198
        %2394 = vmatmul.mubr.f32.gmra.mrb[0].mxu0 %v2125
        %v2395 = vpop.f32.mrb[0].mxu0
        %v2396 = vadd.f32 0.0, %v2395
        %v2397 = vpop.f32.mrb[0].mxu0
        %v2398 = vadd.f32 0.0, %v2397
        %2399 = vmatprep.mubr.f32.mxu0 %v2201
        %2400 = vmatmul.mubr.f32.gmra.mrb[0].mxu0 %v2127
        %v2401 = vpop.f32.mrb[0].mxu0
        %v2402 = vadd.f32 0.0, %v2401
        %v2403 = vpop.f32.mrb[0].mxu0
        %v2404 = vadd.f32 0.0, %v2403
        %2405 = vmatprep.mubr.f32.mxu0 %v2204
        %2406 = vmatmul.mubr.f32.gmra.mrb[0].mxu0 %v2129
        %v2407 = vpop.f32.mrb[0].mxu0
        %v2408 = vadd.f32 0.0, %v2407
        %v2409 = vpop.f32.mrb[0].mxu0
        %v2410 = vadd.f32 0.0, %v2409
        %2411 = vmatprep.mubr.f32.mxu0 %v2207
        %2412 = vmatmul.mubr.f32.gmra.mrb[0].mxu0 %v2131
        %v2413 = vpop.f32.mrb[0].mxu0
        %v2414 = vadd.f32 0.0, %v2413
        %v2415 = vpop.f32.mrb[0].mxu0
        %v2416 = vadd.f32 0.0, %v2415
        %2417 = vmatprep.mubr.f32.mxu0 %v2210
        %2418 = vmatmul.mubr.f32.gmra.mrb[0].mxu0 %v2133
        %v2419 = vpop.f32.mrb[0].mxu0
        %v2420 = vadd.f32 0.0, %v2419
        %v2421 = vpop.f32.mrb[0].mxu0
        %v2422 = vadd.f32 0.0, %v2421
        %2423 = vmatprep.mubr.f32.mxu0 %v2213
        %2424 = vmatmul.mubr.f32.gmra.mrb[0].mxu0 %v2135
        %v2425 = vpop.f32.mrb[0].mxu0
        %v2426 = vadd.f32 0.0, %v2425
        %v2427 = vpop.f32.mrb[0].mxu0
        %v2428 = vadd.f32 0.0, %v2427
        %2429 = vmatprep.mubr.f32.mxu0 %v2216
        %2430 = vmatmul.mubr.f32.gmra.mrb[0].mxu0 %v2137
        %v2431 = vpop.f32.mrb[0].mxu0
        %v2432 = vadd.f32 0.0, %v2431
        %v2433 = vpop.f32.mrb[0].mxu0
        %v2434 = vadd.f32 0.0, %v2433
        %2435 = vmatprep.mubr.f32.mxu0 %v2219
        %2436 = vmatmul.mubr.f32.gmra.mrb[0].mxu0 %v2139
        %v2437 = vpop.f32.mrb[0].mxu0
        %v2438 = vadd.f32 0.0, %v2437
        %v2439 = vpop.f32.mrb[0].mxu0
        %v2440 = vadd.f32 0.0, %v2439
        %2441 = vmatprep.mubr.f32.mxu0 %v2222
        %2442 = vmatmul.mubr.f32.gmra.mrb[0].mxu0 %v2141
        %v2443 = vpop.f32.mrb[0].mxu0
        %v2444 = vadd.f32 0.0, %v2443
        %v2445 = vpop.f32.mrb[0].mxu0
        %v2446 = vadd.f32 0.0, %v2445
        %2447 = vmatprep.mubr.f32.mxu0 %v2225
        %2448 = vmatmul.mubr.f32.gmra.mrb[0].mxu0 %v2143
        %v2449 = vpop.f32.mrb[0].mxu0
        %v2450 = vadd.f32 0.0, %v2449
        %v2451 = vpop.f32.mrb[0].mxu0
        %v2452 = vadd.f32 0.0, %v2451
        %2453 = vmatprep.mubr.f32.mxu0 %v2228
        %2454 = vmatmul.mubr.f32.gmra.mrb[0].mxu0 %v2145
        %v2455 = vpop.f32.mrb[0].mxu0
        %v2456 = vadd.f32 0.0, %v2455
        %v2457 = vpop.f32.mrb[0].mxu0
        %v2458 = vadd.f32 0.0, %v2457
        %2459 = vmatprep.mubr.f32.mxu0 %v2231
        %2460 = vmatmul.mubr.f32.gmra.mrb[0].mxu0 %v2147
        %v2461 = vpop.f32.mrb[0].mxu0
        %v2462 = vadd.f32 0.0, %v2461
        %v2463 = vpop.f32.mrb[0].mxu0
        %v2464 = vadd.f32 0.0, %v2463
        %2465 = vdwg.mxu0
        %2466 = vst [vmem:[%s188 + $0x380] sm:$0xff] %v2300
        %2467 = vst.msk [vmem:[%s188 + $0x388] sm:$0xff] %vm413, %v2302
        %2468 = vst [vmem:[%s188 + $0x390] sm:$0xff] %v2306
        %2469 = vst.msk [vmem:[%s188 + $0x398] sm:$0xff] %vm413, %v2308
        %2470 = vst [vmem:[%s188 + $0x3a0] sm:$0xff] %v2312
        %2471 = vst.msk [vmem:[%s188 + $0x3a8] sm:$0xff] %vm413, %v2314
        %2472 = vst [vmem:[%s188 + $0x3b0] sm:$0xff] %v2318
        %2473 = vst.msk [vmem:[%s188 + $0x3b8] sm:$0xff] %vm413, %v2320
        %2474 = vst [vmem:[%s188 + $0x3c0] sm:$0xff] %v2324
        %2475 = vst.msk [vmem:[%s188 + $0x3c8] sm:$0xff] %vm413, %v2326
        %2476 = vst [vmem:[%s188 + $0x3d0] sm:$0xff] %v2330
        %2477 = vst.msk [vmem:[%s188 + $0x3d8] sm:$0xff] %vm413, %v2332
        %2478 = vst [vmem:[%s188 + $0x3e0] sm:$0xff] %v2336
        %2479 = vst.msk [vmem:[%s188 + $0x3e8] sm:$0xff] %vm413, %v2338
        %2480 = vst [vmem:[%s188 + $0x3f0] sm:$0xff] %v2342
        %2481 = vst.msk [vmem:[%s188 + $0x3f8] sm:$0xff] %vm413, %v2344
        %2482 = vst [vmem:[%s188 + $0x400] sm:$0xff] %v2348
        %2483 = vst.msk [vmem:[%s188 + $0x408] sm:$0xff] %vm413, %v2350
        %2484 = vst [vmem:[%s188 + $0x410] sm:$0xff] %v2354
        %2485 = vst.msk [vmem:[%s188 + $0x418] sm:$0xff] %vm413, %v2356
        %2486 = vst [vmem:[%s188 + $0x420] sm:$0xff] %v2360
        %2487 = vst.msk [vmem:[%s188 + $0x428] sm:$0xff] %vm413, %v2362
        %2488 = vst [vmem:[%s188 + $0x430] sm:$0xff] %v2366
        %2489 = vst.msk [vmem:[%s188 + $0x438] sm:$0xff] %vm413, %v2368
        %2490 = vst [vmem:[%s188 + $0x440] sm:$0xff] %v2372
        %2491 = vst.msk [vmem:[%s188 + $0x448] sm:$0xff] %vm413, %v2374
        %2492 = vst [vmem:[%s188 + $0x450] sm:$0xff] %v2378
        %2493 = vst.msk [vmem:[%s188 + $0x458] sm:$0xff] %vm413, %v2380
        %2494 = vst [vmem:[%s188 + $0x460] sm:$0xff] %v2384
        %2495 = vst.msk [vmem:[%s188 + $0x468] sm:$0xff] %vm413, %v2386
        %2496 = vst [vmem:[%s188 + $0x470] sm:$0xff] %v2390
        %2497 = vst.msk [vmem:[%s188 + $0x478] sm:$0xff] %vm413, %v2392
        %2498 = vst [vmem:[%s188 + $0x480] sm:$0xff] %v2396
        %2499 = vst.msk [vmem:[%s188 + $0x488] sm:$0xff] %vm413, %v2398
        %2500 = vst [vmem:[%s188 + $0x490] sm:$0xff] %v2402
        %2501 = vst.msk [vmem:[%s188 + $0x498] sm:$0xff] %vm413, %v2404
        %2502 = vst [vmem:[%s188 + $0x4a0] sm:$0xff] %v2408
        %2503 = vst.msk [vmem:[%s188 + $0x4a8] sm:$0xff] %vm413, %v2410
        %2504 = vst [vmem:[%s188 + $0x4b0] sm:$0xff] %v2414
        %2505 = vst.msk [vmem:[%s188 + $0x4b8] sm:$0xff] %vm413, %v2416
        %2506 = vst [vmem:[%s188 + $0x4c0] sm:$0xff] %v2420
        %2507 = vst.msk [vmem:[%s188 + $0x4c8] sm:$0xff] %vm413, %v2422
        %2508 = vst [vmem:[%s188 + $0x4d0] sm:$0xff] %v2426
        %2509 = vst.msk [vmem:[%s188 + $0x4d8] sm:$0xff] %vm413, %v2428
        %2510 = vst [vmem:[%s188 + $0x4e0] sm:$0xff] %v2432
        %2511 = vst.msk [vmem:[%s188 + $0x4e8] sm:$0xff] %vm413, %v2434
        %2512 = vst [vmem:[%s188 + $0x4f0] sm:$0xff] %v2438
        %2513 = vst.msk [vmem:[%s188 + $0x4f8] sm:$0xff] %vm413, %v2440
        %2514 = vst [vmem:[%s188 + $0x500] sm:$0xff] %v2444
        %2515 = vst.msk [vmem:[%s188 + $0x508] sm:$0xff] %vm413, %v2446
        %2516 = vst [vmem:[%s188 + $0x510] sm:$0xff] %v2450
        %2517 = vst.msk [vmem:[%s188 + $0x518] sm:$0xff] %vm413, %v2452
        %2518 = vst [vmem:[%s188 + $0x520] sm:$0xff] %v2456
        %2519 = vst.msk [vmem:[%s188 + $0x528] sm:$0xff] %vm413, %v2458
        %2520 = vst [vmem:[%s188 + $0x530] sm:$0xff] %v2462
        %2521 = vst.msk [vmem:[%s188 + $0x538] sm:$0xff] %vm413, %v2464
        %s2522 = sand.u32 %s96, 1
        %s2523 = scalar_lea.sflag [#allocation4], %s2522
        %s2524 = sand.u32 %s96, 1
        %s2525 = smul.addr %s2524, 1344
        %s2526 = scalar_lea.vmem [#allocation5], %s2525
        // Predicated region
        $region37: #{crop_upsample_pallas.1} parent=31 // pred_check
          %p2527 = pneg %p106
        $region38: #{crop_upsample_pallas.1} parent=31 // pred_check_branch
          %2529 = sbr.rel (%p2527) target = $region40
        $region39: #{crop_upsample_pallas.1} parent=31 // pred_region
          %s2531 = ssub.s32 21504, 21504
          %2532 = vsyncadd %s2523, %s2531
          %s2533 = smul.addr %s20, 168
          %s2534 = smul.addr %s2533, 128
          %s2535 = scalar_lea.hbm %s3, %s2534
          %s2536 = sshll.u32 %s2526, 4
          %s2537 = int_to_ptr.vmem [resolvable:$true] %s2536
          %2542 = dma.vmem_to_hbm [thread:$0]  %s2537, 21504, %s2535, %s2523, 256, 256, 16
        $region40: #{crop_upsample_pallas.1} parent=31 // pred_fallthru
          _
      $region32: #{crop_upsample_pallas.1} parent=5 // pred_fallthru
        _
      %p2543 = scmp.le.s32.totalorder 2, %s15
      // Predicated region
      $region41: #{crop_upsample_pallas.1} parent=5 // pred_check
        %p2544 = pneg %p2543
      $region42: #{crop_upsample_pallas.1} parent=5 // pred_check_branch
        %2546 = sbr.rel (%p2544) target = $region44
      $region43: #{crop_upsample_pallas.1} parent=5 // pred_region
        %s2547 = ssub.s32 %s15, 2
        // Predicated region
        $region45: #{crop_upsample_pallas.1} parent=43 // pred_check
          %p2548 = pneg %p112
        $region46: #{crop_upsample_pallas.1} parent=43 // pred_check_branch
          %2550 = sbr.rel (%p2548) target = $region48
        $region47: #{crop_upsample_pallas.1} parent=43 // pred_region
          %s2551 = sand.u32 %s97, 1
          %s2552 = scalar_lea.sflag [#allocation4], %s2551
          %s2553 = sand.u32 %s97, 1
          %s2554 = smul.addr %s2553, 1344
          %s2555 = scalar_lea.vmem [#allocation5], %s2554
          %2556 = dma.done %s2552, 21504
        $region48: #{crop_upsample_pallas.1} parent=43 // pred_fallthru
          _
      $region44: #{crop_upsample_pallas.1} parent=5 // pred_fallthru
        _
    $region6: #{crop_upsample_pallas.1} parent=1 // loop_footer
      %s19 = sadd.s32 1, %s15
    $region7: #{crop_upsample_pallas.1} parent=1 // loop_footer_branch
      %14 = sbr.rel target = $region3
    $region8: #{crop_upsample_pallas.1} parent=1 // loop_exit
      _
    %2557 = vsyncpa [#allocation3], 1
    %s2558 = scalar_lea.sflag [#allocation3], 1
    %2559 = vsyncpa %s2558, 1
    %2560 = vsyncpa [#allocation4], 1
    %s2561 = scalar_lea.sflag [#allocation4], 1
    %2562 = vsyncpa %s2561, 1

</llo_original>
